<compile_context>
chip_gen: v7x
topology: tpu7x:2x2x1
jax: 0.10.0
libtpu: 0.0.40
codegen_flags: <defaults>
</compile_context>

<pallas_src>
import jax
import jax.numpy as jnp
from jax.experimental import pallas as pl
from jax.experimental.pallas import tpu as pltpu


# ---------------------------------------------------------------------------
# Parameter packing / BN folding (plain JAX glue, runs once host-side)
# ---------------------------------------------------------------------------
def prepare_params(w3, w13, g1, b1, m1, v1, wd, wp, g2, b2, m2, v2, w11,
                   eps=1e-3):
    f32 = jnp.float32
    w3, w13, wd, wp, w11 = (a.astype(f32) for a in (w3, w13, wd, wp, w11))
    g1, b1, m1, v1 = (a.astype(f32) for a in (g1, b1, m1, v1))
    g2, b2, m2, v2 = (a.astype(f32) for a in (g2, b2, m2, v2))

    Ch = w3.shape[0]
    C = wp.shape[0]

    s1 = g1 / jnp.sqrt(v1 + eps)
    sh1 = b1 - m1 * s1
    s2 = g2 / jnp.sqrt(v2 + eps)
    sh2 = b2 - m2 * s2

    w3m = w3[:, :, :, 0]      # (co, ci, kh)
    w13m = w13[:, :, 0, :]    # (co, ci, kw)

    # Branch 1: conv3x1 -> BN -> conv1x3 -> BN  fused into one 3x3 stencil.
    # weff1[c, ci, kh, kw] = s1[c] * sum_m w13[c,m,kw] * s1[m] * w3[m,ci,kh]
    weff1 = jnp.einsum('cmw,m,mih->cihw', w13m, s1, w3m) * s1[:, None, None, None]
    bias1 = sh1 + s1 * jnp.einsum('cmw,m->c', w13m, sh1)
    # Branch 2: conv1x3 -> BN -> conv3x1 -> BN.
    weff2 = jnp.einsum('cmh,m,miw->cihw', w3m, s1, w13m) * s1[:, None, None, None]
    bias2 = sh1 + s1 * jnp.einsum('cmh,m->c', w3m, sh1)

    # Block-diagonal per-tap channel-mixing columns: wbr[t, ci_global, co, 1].
    wbr = jnp.zeros((3, 3, C, C), f32)
    wbr = wbr.at[:, :, :Ch, :Ch].set(jnp.transpose(weff1, (2, 3, 1, 0)))
    wbr = wbr.at[:, :, Ch:, Ch:].set(jnp.transpose(weff2, (2, 3, 1, 0)))
    wbr = wbr.reshape(9, C, C)[..., None]

    bias_br = jnp.concatenate([bias1, bias2]).reshape(C, 1)
    shb = jnp.concatenate([sh1, sh1]).reshape(C, 1)   # BN1 shift (border value)

    # Depthwise taps: (9, C, 1) per-channel weights.
    wd_pack = jnp.transpose(wd[:, 0, :, :], (1, 2, 0)).reshape(9, C)[..., None]

    # Pointwise 1x1 with BN2 scale folded in; stored as (ci, co, 1) columns.
    wp_eff = s2[:, None] * wp[:, :, 0, 0]            # (co, ci)
    wp_pack = jnp.transpose(wp_eff)[..., None]       # (ci, co, 1)
    sh2c = sh2.reshape(C, 1)

    # conv1x1 with the channel shuffle folded into its output-row order, plus
    # the one-hot permutation matrix used to add the residual pre-shuffled.
    perm = jnp.asarray([(o % 2) * Ch + o // 2 for o in range(C)], jnp.int32)
    w11_shuf = w11[:, :, 0, 0][perm, :]              # (co_shuffled, ci)
    w11_pack = jnp.transpose(w11_shuf)[..., None]    # (ci, co, 1)
    pmat = jnp.transpose(jnp.eye(C, dtype=f32)[perm, :])[..., None]  # (ci, co, 1)

    return (wbr, bias_br, shb, wd_pack, wp_pack, sh2c, w11_pack, pmat)


# ---------------------------------------------------------------------------
# Pallas kernel (everything lane-dense at (C, H*W))
# ---------------------------------------------------------------------------
def make_fcb_kernel(C, H, W, dilate):
    Ch = C // 2
    HW = H * W
    d = dilate

    def kernel(x_ref, pm_ref, wbr_ref, bbr_ref, shb_ref, wd_ref, wp_ref,
               sh2_ref, w11_ref, pmat_ref, o_ref):
        x = x_ref[...]                                # (C, HW) f32, lane-dense
        pm = pm_ref[...]                              # (2, HW) int32
        row, col = pm[0:1, :], pm[1:2, :]

        wbr = wbr_ref[...]                            # (9, C, C, 1)
        wd = wd_ref[...]                              # (9, C, 1)
        wp = wp_ref[...]                              # (C, C, 1)
        w11 = w11_ref[...]                            # (C, C, 1)
        pmat = pmat_ref[...]                          # (C, C, 1)

        def shift(arr, dh, dw):
            """arr[:, i+dh, j+dw] on the flat (C, H*W) layout; zero outside.

            XLU roll along the lane axis + boundary mask; never reshapes or
            concatenates, so the VPU keeps the full 128-lane width.
            """
            s = dh * W + dw
            out = arr if s == 0 else pltpu.roll(arr, (-s) % HW, 1)
            cond = None

            def _and(a, b):
                return b if a is None else jnp.logical_and(a, b)

            if dh > 0:
                cond = _and(cond, row < H - dh)
            elif dh < 0:
                cond = _and(cond, row >= -dh)
            if dw > 0:
                cond = _and(cond, col < W - dw)
            elif dw < 0:
                cond = _and(cond, col >= -dw)
            if cond is None:
                return out
            return jnp.where(cond, out, 0.0)

        # --- Stage 1: both conv branches (conv3x1/conv1x3 + shared BN1, both
        #     orders) as a single fused 9-tap stencil with block-diagonal
        #     channel mixing, done as VPU broadcast FMAs (C is tiny).
        acc = jnp.zeros((C, HW), jnp.float32)
        for kh in range(3):
            for kw in range(3):
                t = kh * 3 + kw
                xt = shift(x, kh - 1, kw - 1)
                for ci in range(C):
                    acc = acc + wbr[t, ci] * xt[ci:ci + 1, :]
        y = acc + bbr_ref[...]
        # BN1-shift border values: rows 0/H-1 for branch 1, cols 0/W-1 for
        # branch 2 (they come from the intermediate zero padding + BN shift).
        row_border = jnp.logical_or(row == 0, row == H - 1)
        col_border = jnp.logical_or(col == 0, col == W - 1)
        is_b1 = jax.lax.broadcasted_iota(jnp.int32, (C, 1), 0) < Ch
        border = jnp.logical_or(
            jnp.logical_and(is_b1, row_border),
            jnp.logical_and(jnp.logical_not(is_b1), col_border))
        y = jnp.where(border, shb_ref[...], y)
        # Dropout2d has p == 0 here -> identity (matches the module's guard).

        # --- Stage 2: depthwise 3x3, dilation d, padding d: 9 dilated
        #     roll+mask taps with per-channel (C,1) weights.
        dwo = jnp.zeros((C, HW), jnp.float32)
        for kh in range(3):
            for kw in range(3):
                t = kh * 3 + kw
                dwo = dwo + wd[t] * shift(y, (kh - 1) * d, (kw - 1) * d)

        # --- Stage 3: pointwise 1x1 (BN2 scale folded into the weights) +
        #     BN2 shift + ReLU, as VPU broadcast FMAs.
        acc2 = jnp.zeros((C, HW), jnp.float32)
        for ci in range(C):
            acc2 = acc2 + wp[ci] * dwo[ci:ci + 1, :]
        z = jnp.maximum(acc2 + sh2_ref[...], 0.0)

        # --- Stage 4: conv1x1 with pre-shuffled output rows + residual added
        #     through a one-hot permutation matrix (channel shuffle folded in),
        #     ReLU, single unmasked lane-dense store.
        acc3 = jnp.zeros((C, HW), jnp.float32)
        for ci in range(C):
            acc3 = acc3 + w11[ci] * z[ci:ci + 1, :] + pmat[ci] * x[ci:ci + 1, :]
        o_ref[...] = jnp.maximum(acc3, 0.0)

    return kernel


def fcb_forward(x, params, *, dilate):
    B, C, H, W = x.shape
    HW = H * W
    wbr, bias_br, shb, wd_pack, wp_pack, sh2c, w11_pack, pmat = params

    # Row / column index maps for the boundary masks (computed once, host-side,
    # so the kernel never does integer div/mod).
    ii = jnp.arange(HW, dtype=jnp.int32)
    posmap = jnp.stack([ii // W, ii % W]).astype(jnp.int32)     # (2, HW)

    kernel = make_fcb_kernel(C, H, W, dilate)
    out = pl.pallas_call(
        kernel,
        out_shape=jax.ShapeDtypeStruct((B, C, HW), jnp.float32),
        grid=(B,),
        in_specs=[
            pl.BlockSpec((None, C, HW), lambda b: (b, 0, 0)),     # x (lane-dense)
            pl.BlockSpec((2, HW), lambda b: (0, 0)),              # row/col maps
            pl.BlockSpec((9, C, C, 1), lambda b: (0, 0, 0, 0)),   # fused branch taps
            pl.BlockSpec((C, 1), lambda b: (0, 0)),               # branch bias
            pl.BlockSpec((C, 1), lambda b: (0, 0)),               # BN1 shift (border)
            pl.BlockSpec((9, C, 1), lambda b: (0, 0, 0)),         # depthwise taps
            pl.BlockSpec((C, C, 1), lambda b: (0, 0, 0)),         # pointwise (BN2-folded)
            pl.BlockSpec((C, 1), lambda b: (0, 0)),               # BN2 shift
            pl.BlockSpec((C, C, 1), lambda b: (0, 0, 0)),         # conv1x1 (shuffled rows)
            pl.BlockSpec((C, C, 1), lambda b: (0, 0, 0)),         # residual permutation
        ],
        out_specs=pl.BlockSpec((None, C, HW), lambda b: (b, 0, 0)),
        compiler_params=pltpu.CompilerParams(
            dimension_semantics=("parallel",),
            vmem_limit_bytes=32 * 1024 * 1024),
    )(x.reshape(B, C, HW), posmap, wbr, bias_br, shb, wd_pack, wp_pack,
      sh2c, w11_pack, pmat)
    return out.reshape(B, C, H, W)


# ---------------------------------------------------------------------------
# Pure-JAX reference (validation only; HIGHEST precision so it is true f32)
# ---------------------------------------------------------------------------
def _conv(x, w, padding, dilation=(1, 1), groups=1):
    return jax.lax.conv_general_dilated(
        x, w, window_strides=(1, 1), padding=padding,
        rhs_dilation=dilation, dimension_numbers=("NCHW", "OIHW", "NCHW"),
        feature_group_count=groups, precision=jax.lax.Precision.HIGHEST)


def _bn(x, g, b, m, v, eps=1e-3):
    r = lambda a: a[None, :, None, None]
    return (x - r(m)) / jnp.sqrt(r(v) + eps) * r(g) + r(b)


def fcb_reference(x, w3, w13, g1, b1, m1, v1, wd, wp, g2, b2, m2, v2, w11,
                  dilate):
    C = x.shape[1]
    Ch = C // 2
    d = dilate
    x1, x2 = x[:, :Ch], x[:, Ch:]
    x1 = _bn(_conv(x1, w3, ((0, 0), (1, 1))), g1, b1, m1, v1)
    x1 = _bn(_conv(x1, w13, ((1, 1), (0, 0))), g1, b1, m1, v1)
    x2 = _bn(_conv(x2, w13, ((1, 1), (0, 0))), g1, b1, m1, v1)
    x2 = _bn(_conv(x2, w3, ((0, 0), (1, 1))), g1, b1, m1, v1)
    y = jnp.concatenate([x1, x2], axis=1)
    y = _conv(y, wd, ((d, d), (d, d)), dilation=(d, d), groups=C)
    y = _conv(y, wp, ((0, 0), (0, 0)))
    y = jax.nn.relu(_bn(y, g2, b2, m2, v2))
    y = _conv(y, w11, ((0, 0), (0, 0)))
    y = jax.nn.relu(y + x)
    B, C_, H_, W_ = y.shape
    y = y.reshape(B, 2, C_ // 2, H_, W_).transpose(0, 2, 1, 3, 4)
    return y.reshape(B, C_, H_, W_)


# ---------------------------------------------------------------------------
if __name__ == "__main__":
    B, C, H, W = 2, 4, 16, 16
    dilate = 2
    Ch = C // 2

    key = jax.random.PRNGKey(0)
    ks = jax.random.split(key, 14)
    w3 = jax.random.normal(ks[0], (Ch, Ch, 3, 1), jnp.float32) * 0.3
    w13 = jax.random.normal(ks[1], (Ch, Ch, 1, 3), jnp.float32) * 0.3
    g1 = jax.random.normal(ks[2], (Ch,), jnp.float32) * 0.1 + 1.0
    b1 = jax.random.normal(ks[3], (Ch,), jnp.float32) * 0.1
    m1 = jax.random.normal(ks[4], (Ch,), jnp.float32) * 0.1
    v1 = jax.random.uniform(ks[5], (Ch,), jnp.float32, 0.5, 1.5)
    wd = jax.random.normal(ks[6], (C, 1, 3, 3), jnp.float32) * 0.3
    wp = jax.random.normal(ks[7], (C, C, 1, 1), jnp.float32) * 0.3
    g2 = jax.random.normal(ks[8], (C,), jnp.float32) * 0.1 + 1.0
    b2 = jax.random.normal(ks[9], (C,), jnp.float32) * 0.1
    m2 = jax.random.normal(ks[10], (C,), jnp.float32) * 0.1
    v2 = jax.random.uniform(ks[11], (C,), jnp.float32, 0.5, 1.5)
    w11 = jax.random.normal(ks[12], (C, C, 1, 1), jnp.float32) * 0.3
    x = jax.random.normal(ks[13], (B, C, H, W), jnp.float32)

    params = prepare_params(w3, w13, g1, b1, m1, v1, wd, wp,
                            g2, b2, m2, v2, w11)

    out = fcb_forward(x, params, dilate=dilate)
    out = jax.block_until_ready(out)

    ref = fcb_reference(x, w3, w13, g1, b1, m1, v1, wd, wp, g2, b2, m2, v2,
                        w11, dilate)
    assert out.shape == (B, C, H, W)
    assert jnp.allclose(out, ref, rtol=1e-3, atol=1e-3), "mismatch vs reference"

    print("KERNEL_OK")
</pallas_src>

<mosaic_0001>
module attributes {stable_mosaic.version = 11 : i64} {
  func.func @kernel(%arg0: i32, %arg1: memref<1x4x256xf32, #tpu.memory_space<vmem>>, %arg2: memref<2x256xi32, #tpu.memory_space<vmem>>, %arg3: memref<9x4x4x1xf32, #tpu.memory_space<vmem>>, %arg4: memref<4x1xf32, #tpu.memory_space<vmem>>, %arg5: memref<4x1xf32, #tpu.memory_space<vmem>>, %arg6: memref<9x4x1xf32, #tpu.memory_space<vmem>>, %arg7: memref<4x4x1xf32, #tpu.memory_space<vmem>>, %arg8: memref<4x1xf32, #tpu.memory_space<vmem>>, %arg9: memref<4x4x1xf32, #tpu.memory_space<vmem>>, %arg10: memref<4x4x1xf32, #tpu.memory_space<vmem>>, %arg11: memref<1x4x256xf32, #tpu.memory_space<vmem>>) attributes {dimension_semantics = [#tpu.dimension_semantics<parallel>], iteration_bounds = array<i64: 2>, scalar_prefetch = 0 : i64, scratch_operands = 0 : i64, tpu.core_type = #tpu.core_type<tc>, window_params = [{transform_indices = @transform_0, window_bounds = array<i64: 1, 4, 256>}, {pipeline_mode = #tpu.pipeline_mode<synchronous>, transform_indices = @transform_1, window_bounds = array<i64: 2, 256>}, {pipeline_mode = #tpu.pipeline_mode<synchronous>, transform_indices = @transform_2, window_bounds = array<i64: 9, 4, 4, 1>}, {pipeline_mode = #tpu.pipeline_mode<synchronous>, transform_indices = @transform_3, window_bounds = array<i64: 4, 1>}, {pipeline_mode = #tpu.pipeline_mode<synchronous>, transform_indices = @transform_4, window_bounds = array<i64: 4, 1>}, {pipeline_mode = #tpu.pipeline_mode<synchronous>, transform_indices = @transform_5, window_bounds = array<i64: 9, 4, 1>}, {pipeline_mode = #tpu.pipeline_mode<synchronous>, transform_indices = @transform_6, window_bounds = array<i64: 4, 4, 1>}, {pipeline_mode = #tpu.pipeline_mode<synchronous>, transform_indices = @transform_7, window_bounds = array<i64: 4, 1>}, {pipeline_mode = #tpu.pipeline_mode<synchronous>, transform_indices = @transform_8, window_bounds = array<i64: 4, 4, 1>}, {pipeline_mode = #tpu.pipeline_mode<synchronous>, transform_indices = @transform_9, window_bounds = array<i64: 4, 4, 1>}, {transform_indices = @transform_10, window_bounds = array<i64: 1, 4, 256>}]} {
    %c0 = arith.constant 0 : index
    %c0_0 = arith.constant 0 : index
    %c0_1 = arith.constant 0 : index
    %0 = vector.load %arg1[%c0, %c0_0, %c0_1] : memref<1x4x256xf32, #tpu.memory_space<vmem>>, vector<1x4x256xf32>
    %1 = vector.shape_cast %0 : vector<1x4x256xf32> to vector<4x256xf32>
    %c0_2 = arith.constant 0 : index
    %c0_3 = arith.constant 0 : index
    %2 = vector.load %arg2[%c0_2, %c0_3] : memref<2x256xi32, #tpu.memory_space<vmem>>, vector<2x256xi32>
    %3 = vector.extract_strided_slice %2 {offsets = [0, 0], sizes = [1, 256], strides = [1, 1]} : vector<2x256xi32> to vector<1x256xi32>
    %4 = vector.extract_strided_slice %2 {offsets = [1, 0], sizes = [1, 256], strides = [1, 1]} : vector<2x256xi32> to vector<1x256xi32>
    %c0_4 = arith.constant 0 : index
    %c0_5 = arith.constant 0 : index
    %c0_6 = arith.constant 0 : index
    %c0_7 = arith.constant 0 : index
    %5 = vector.load %arg3[%c0_4, %c0_5, %c0_6, %c0_7] : memref<9x4x4x1xf32, #tpu.memory_space<vmem>>, vector<9x4x4x1xf32>
    %c0_8 = arith.constant 0 : index
    %c0_9 = arith.constant 0 : index
    %c0_10 = arith.constant 0 : index
    %6 = vector.load %arg6[%c0_8, %c0_9, %c0_10] : memref<9x4x1xf32, #tpu.memory_space<vmem>>, vector<9x4x1xf32>
    %c0_11 = arith.constant 0 : index
    %c0_12 = arith.constant 0 : index
    %c0_13 = arith.constant 0 : index
    %7 = vector.load %arg7[%c0_11, %c0_12, %c0_13] : memref<4x4x1xf32, #tpu.memory_space<vmem>>, vector<4x4x1xf32>
    %c0_14 = arith.constant 0 : index
    %c0_15 = arith.constant 0 : index
    %c0_16 = arith.constant 0 : index
    %8 = vector.load %arg9[%c0_14, %c0_15, %c0_16] : memref<4x4x1xf32, #tpu.memory_space<vmem>>, vector<4x4x1xf32>
    %c0_17 = arith.constant 0 : index
    %c0_18 = arith.constant 0 : index
    %c0_19 = arith.constant 0 : index
    %9 = vector.load %arg10[%c0_17, %c0_18, %c0_19] : memref<4x4x1xf32, #tpu.memory_space<vmem>>, vector<4x4x1xf32>
    %cst = arith.constant 0.000000e+00 : f32
    %10 = vector.broadcast %cst : f32 to vector<4x256xf32>
    %c17_i32 = arith.constant 17 : i32
    %11 = tpu.dynamic_rotate %1 by %c17_i32 dim 1 : vector<4x256xf32>, i32 -> vector<4x256xf32>
    %c1_i32 = arith.constant 1 : i32
    %12 = vector.broadcast %c1_i32 : i32 to vector<1x256xi32>
    %13 = arith.cmpi sge, %3, %12 : vector<1x256xi32>
    %c1_i32_20 = arith.constant 1 : i32
    %14 = vector.broadcast %c1_i32_20 : i32 to vector<1x256xi32>
    %15 = arith.cmpi sge, %4, %14 : vector<1x256xi32>
    %16 = arith.andi %13, %15 : vector<1x256xi1>
    %cst_21 = arith.constant 0.000000e+00 : f32
    %17 = vector.shape_cast %16 : vector<1x256xi1> to vector<1x256xi1>
    %18 = vector.broadcast %17 : vector<1x256xi1> to vector<4x256xi1>
    %19 = vector.broadcast %cst_21 : f32 to vector<4x256xf32>
    %20 = arith.select %18, %11, %19 : vector<4x256xi1>, vector<4x256xf32>
    %21 = vector.extract_strided_slice %5 {offsets = [0, 0, 0, 0], sizes = [1, 1, 4, 1], strides = [1, 1, 1, 1]} : vector<9x4x4x1xf32> to vector<1x1x4x1xf32>
    %22 = vector.shape_cast %21 : vector<1x1x4x1xf32> to vector<4x1xf32>
    %23 = vector.extract_strided_slice %20 {offsets = [0, 0], sizes = [1, 256], strides = [1, 1]} : vector<4x256xf32> to vector<1x256xf32>
    %24 = vector.broadcast %22 : vector<4x1xf32> to vector<4x256xf32>
    %25 = vector.broadcast %23 : vector<1x256xf32> to vector<4x256xf32>
    %26 = arith.mulf %24, %25 : vector<4x256xf32>
    %27 = arith.addf %10, %26 : vector<4x256xf32>
    %28 = vector.extract_strided_slice %5 {offsets = [0, 1, 0, 0], sizes = [1, 1, 4, 1], strides = [1, 1, 1, 1]} : vector<9x4x4x1xf32> to vector<1x1x4x1xf32>
    %29 = vector.shape_cast %28 : vector<1x1x4x1xf32> to vector<4x1xf32>
    %30 = vector.extract_strided_slice %20 {offsets = [1, 0], sizes = [1, 256], strides = [1, 1]} : vector<4x256xf32> to vector<1x256xf32>
    %31 = vector.broadcast %29 : vector<4x1xf32> to vector<4x256xf32>
    %32 = vector.broadcast %30 : vector<1x256xf32> to vector<4x256xf32>
    %33 = arith.mulf %31, %32 : vector<4x256xf32>
    %34 = arith.addf %27, %33 : vector<4x256xf32>
    %35 = vector.extract_strided_slice %5 {offsets = [0, 2, 0, 0], sizes = [1, 1, 4, 1], strides = [1, 1, 1, 1]} : vector<9x4x4x1xf32> to vector<1x1x4x1xf32>
    %36 = vector.shape_cast %35 : vector<1x1x4x1xf32> to vector<4x1xf32>
    %37 = vector.extract_strided_slice %20 {offsets = [2, 0], sizes = [1, 256], strides = [1, 1]} : vector<4x256xf32> to vector<1x256xf32>
    %38 = vector.broadcast %36 : vector<4x1xf32> to vector<4x256xf32>
    %39 = vector.broadcast %37 : vector<1x256xf32> to vector<4x256xf32>
    %40 = arith.mulf %38, %39 : vector<4x256xf32>
    %41 = arith.addf %34, %40 : vector<4x256xf32>
    %42 = vector.extract_strided_slice %5 {offsets = [0, 3, 0, 0], sizes = [1, 1, 4, 1], strides = [1, 1, 1, 1]} : vector<9x4x4x1xf32> to vector<1x1x4x1xf32>
    %43 = vector.shape_cast %42 : vector<1x1x4x1xf32> to vector<4x1xf32>
    %44 = vector.extract_strided_slice %20 {offsets = [3, 0], sizes = [1, 256], strides = [1, 1]} : vector<4x256xf32> to vector<1x256xf32>
    %45 = vector.broadcast %43 : vector<4x1xf32> to vector<4x256xf32>
    %46 = vector.broadcast %44 : vector<1x256xf32> to vector<4x256xf32>
    %47 = arith.mulf %45, %46 : vector<4x256xf32>
    %48 = arith.addf %41, %47 : vector<4x256xf32>
    %c16_i32 = arith.constant 16 : i32
    %49 = tpu.dynamic_rotate %1 by %c16_i32 dim 1 : vector<4x256xf32>, i32 -> vector<4x256xf32>
    %c1_i32_22 = arith.constant 1 : i32
    %50 = vector.broadcast %c1_i32_22 : i32 to vector<1x256xi32>
    %51 = arith.cmpi sge, %3, %50 : vector<1x256xi32>
    %cst_23 = arith.constant 0.000000e+00 : f32
    %52 = vector.shape_cast %51 : vector<1x256xi1> to vector<1x256xi1>
    %53 = vector.broadcast %52 : vector<1x256xi1> to vector<4x256xi1>
    %54 = vector.broadcast %cst_23 : f32 to vector<4x256xf32>
    %55 = arith.select %53, %49, %54 : vector<4x256xi1>, vector<4x256xf32>
    %56 = vector.extract_strided_slice %5 {offsets = [1, 0, 0, 0], sizes = [1, 1, 4, 1], strides = [1, 1, 1, 1]} : vector<9x4x4x1xf32> to vector<1x1x4x1xf32>
    %57 = vector.shape_cast %56 : vector<1x1x4x1xf32> to vector<4x1xf32>
    %58 = vector.extract_strided_slice %55 {offsets = [0, 0], sizes = [1, 256], strides = [1, 1]} : vector<4x256xf32> to vector<1x256xf32>
    %59 = vector.broadcast %57 : vector<4x1xf32> to vector<4x256xf32>
    %60 = vector.broadcast %58 : vector<1x256xf32> to vector<4x256xf32>
    %61 = arith.mulf %59, %60 : vector<4x256xf32>
    %62 = arith.addf %48, %61 : vector<4x256xf32>
    %63 = vector.extract_strided_slice %5 {offsets = [1, 1, 0, 0], sizes = [1, 1, 4, 1], strides = [1, 1, 1, 1]} : vector<9x4x4x1xf32> to vector<1x1x4x1xf32>
    %64 = vector.shape_cast %63 : vector<1x1x4x1xf32> to vector<4x1xf32>
    %65 = vector.extract_strided_slice %55 {offsets = [1, 0], sizes = [1, 256], strides = [1, 1]} : vector<4x256xf32> to vector<1x256xf32>
    %66 = vector.broadcast %64 : vector<4x1xf32> to vector<4x256xf32>
    %67 = vector.broadcast %65 : vector<1x256xf32> to vector<4x256xf32>
    %68 = arith.mulf %66, %67 : vector<4x256xf32>
    %69 = arith.addf %62, %68 : vector<4x256xf32>
    %70 = vector.extract_strided_slice %5 {offsets = [1, 2, 0, 0], sizes = [1, 1, 4, 1], strides = [1, 1, 1, 1]} : vector<9x4x4x1xf32> to vector<1x1x4x1xf32>
    %71 = vector.shape_cast %70 : vector<1x1x4x1xf32> to vector<4x1xf32>
    %72 = vector.extract_strided_slice %55 {offsets = [2, 0], sizes = [1, 256], strides = [1, 1]} : vector<4x256xf32> to vector<1x256xf32>
    %73 = vector.broadcast %71 : vector<4x1xf32> to vector<4x256xf32>
    %74 = vector.broadcast %72 : vector<1x256xf32> to vector<4x256xf32>
    %75 = arith.mulf %73, %74 : vector<4x256xf32>
    %76 = arith.addf %69, %75 : vector<4x256xf32>
    %77 = vector.extract_strided_slice %5 {offsets = [1, 3, 0, 0], sizes = [1, 1, 4, 1], strides = [1, 1, 1, 1]} : vector<9x4x4x1xf32> to vector<1x1x4x1xf32>
    %78 = vector.shape_cast %77 : vector<1x1x4x1xf32> to vector<4x1xf32>
    %79 = vector.extract_strided_slice %55 {offsets = [3, 0], sizes = [1, 256], strides = [1, 1]} : vector<4x256xf32> to vector<1x256xf32>
    %80 = vector.broadcast %78 : vector<4x1xf32> to vector<4x256xf32>
    %81 = vector.broadcast %79 : vector<1x256xf32> to vector<4x256xf32>
    %82 = arith.mulf %80, %81 : vector<4x256xf32>
    %83 = arith.addf %76, %82 : vector<4x256xf32>
    %c15_i32 = arith.constant 15 : i32
    %84 = tpu.dynamic_rotate %1 by %c15_i32 dim 1 : vector<4x256xf32>, i32 -> vector<4x256xf32>
    %c1_i32_24 = arith.constant 1 : i32
    %85 = vector.broadcast %c1_i32_24 : i32 to vector<1x256xi32>
    %86 = arith.cmpi sge, %3, %85 : vector<1x256xi32>
    %c15_i32_25 = arith.constant 15 : i32
    %87 = vector.broadcast %c15_i32_25 : i32 to vector<1x256xi32>
    %88 = arith.cmpi slt, %4, %87 : vector<1x256xi32>
    %89 = arith.andi %86, %88 : vector<1x256xi1>
    %cst_26 = arith.constant 0.000000e+00 : f32
    %90 = vector.shape_cast %89 : vector<1x256xi1> to vector<1x256xi1>
    %91 = vector.broadcast %90 : vector<1x256xi1> to vector<4x256xi1>
    %92 = vector.broadcast %cst_26 : f32 to vector<4x256xf32>
    %93 = arith.select %91, %84, %92 : vector<4x256xi1>, vector<4x256xf32>
    %94 = vector.extract_strided_slice %5 {offsets = [2, 0, 0, 0], sizes = [1, 1, 4, 1], strides = [1, 1, 1, 1]} : vector<9x4x4x1xf32> to vector<1x1x4x1xf32>
    %95 = vector.shape_cast %94 : vector<1x1x4x1xf32> to vector<4x1xf32>
    %96 = vector.extract_strided_slice %93 {offsets = [0, 0], sizes = [1, 256], strides = [1, 1]} : vector<4x256xf32> to vector<1x256xf32>
    %97 = vector.broadcast %95 : vector<4x1xf32> to vector<4x256xf32>
    %98 = vector.broadcast %96 : vector<1x256xf32> to vector<4x256xf32>
    %99 = arith.mulf %97, %98 : vector<4x256xf32>
    %100 = arith.addf %83, %99 : vector<4x256xf32>
    %101 = vector.extract_strided_slice %5 {offsets = [2, 1, 0, 0], sizes = [1, 1, 4, 1], strides = [1, 1, 1, 1]} : vector<9x4x4x1xf32> to vector<1x1x4x1xf32>
    %102 = vector.shape_cast %101 : vector<1x1x4x1xf32> to vector<4x1xf32>
    %103 = vector.extract_strided_slice %93 {offsets = [1, 0], sizes = [1, 256], strides = [1, 1]} : vector<4x256xf32> to vector<1x256xf32>
    %104 = vector.broadcast %102 : vector<4x1xf32> to vector<4x256xf32>
    %105 = vector.broadcast %103 : vector<1x256xf32> to vector<4x256xf32>
    %106 = arith.mulf %104, %105 : vector<4x256xf32>
    %107 = arith.addf %100, %106 : vector<4x256xf32>
    %108 = vector.extract_strided_slice %5 {offsets = [2, 2, 0, 0], sizes = [1, 1, 4, 1], strides = [1, 1, 1, 1]} : vector<9x4x4x1xf32> to vector<1x1x4x1xf32>
    %109 = vector.shape_cast %108 : vector<1x1x4x1xf32> to vector<4x1xf32>
    %110 = vector.extract_strided_slice %93 {offsets = [2, 0], sizes = [1, 256], strides = [1, 1]} : vector<4x256xf32> to vector<1x256xf32>
    %111 = vector.broadcast %109 : vector<4x1xf32> to vector<4x256xf32>
    %112 = vector.broadcast %110 : vector<1x256xf32> to vector<4x256xf32>
    %113 = arith.mulf %111, %112 : vector<4x256xf32>
    %114 = arith.addf %107, %113 : vector<4x256xf32>
    %115 = vector.extract_strided_slice %5 {offsets = [2, 3, 0, 0], sizes = [1, 1, 4, 1], strides = [1, 1, 1, 1]} : vector<9x4x4x1xf32> to vector<1x1x4x1xf32>
    %116 = vector.shape_cast %115 : vector<1x1x4x1xf32> to vector<4x1xf32>
    %117 = vector.extract_strided_slice %93 {offsets = [3, 0], sizes = [1, 256], strides = [1, 1]} : vector<4x256xf32> to vector<1x256xf32>
    %118 = vector.broadcast %116 : vector<4x1xf32> to vector<4x256xf32>
    %119 = vector.broadcast %117 : vector<1x256xf32> to vector<4x256xf32>
    %120 = arith.mulf %118, %119 : vector<4x256xf32>
    %121 = arith.addf %114, %120 : vector<4x256xf32>
    %c1_i32_27 = arith.constant 1 : i32
    %122 = tpu.dynamic_rotate %1 by %c1_i32_27 dim 1 : vector<4x256xf32>, i32 -> vector<4x256xf32>
    %c1_i32_28 = arith.constant 1 : i32
    %123 = vector.broadcast %c1_i32_28 : i32 to vector<1x256xi32>
    %124 = arith.cmpi sge, %4, %123 : vector<1x256xi32>
    %cst_29 = arith.constant 0.000000e+00 : f32
    %125 = vector.shape_cast %124 : vector<1x256xi1> to vector<1x256xi1>
    %126 = vector.broadcast %125 : vector<1x256xi1> to vector<4x256xi1>
    %127 = vector.broadcast %cst_29 : f32 to vector<4x256xf32>
    %128 = arith.select %126, %122, %127 : vector<4x256xi1>, vector<4x256xf32>
    %129 = vector.extract_strided_slice %5 {offsets = [3, 0, 0, 0], sizes = [1, 1, 4, 1], strides = [1, 1, 1, 1]} : vector<9x4x4x1xf32> to vector<1x1x4x1xf32>
    %130 = vector.shape_cast %129 : vector<1x1x4x1xf32> to vector<4x1xf32>
    %131 = vector.extract_strided_slice %128 {offsets = [0, 0], sizes = [1, 256], strides = [1, 1]} : vector<4x256xf32> to vector<1x256xf32>
    %132 = vector.broadcast %130 : vector<4x1xf32> to vector<4x256xf32>
    %133 = vector.broadcast %131 : vector<1x256xf32> to vector<4x256xf32>
    %134 = arith.mulf %132, %133 : vector<4x256xf32>
    %135 = arith.addf %121, %134 : vector<4x256xf32>
    %136 = vector.extract_strided_slice %5 {offsets = [3, 1, 0, 0], sizes = [1, 1, 4, 1], strides = [1, 1, 1, 1]} : vector<9x4x4x1xf32> to vector<1x1x4x1xf32>
    %137 = vector.shape_cast %136 : vector<1x1x4x1xf32> to vector<4x1xf32>
    %138 = vector.extract_strided_slice %128 {offsets = [1, 0], sizes = [1, 256], strides = [1, 1]} : vector<4x256xf32> to vector<1x256xf32>
    %139 = vector.broadcast %137 : vector<4x1xf32> to vector<4x256xf32>
    %140 = vector.broadcast %138 : vector<1x256xf32> to vector<4x256xf32>
    %141 = arith.mulf %139, %140 : vector<4x256xf32>
    %142 = arith.addf %135, %141 : vector<4x256xf32>
    %143 = vector.extract_strided_slice %5 {offsets = [3, 2, 0, 0], sizes = [1, 1, 4, 1], strides = [1, 1, 1, 1]} : vector<9x4x4x1xf32> to vector<1x1x4x1xf32>
    %144 = vector.shape_cast %143 : vector<1x1x4x1xf32> to vector<4x1xf32>
    %145 = vector.extract_strided_slice %128 {offsets = [2, 0], sizes = [1, 256], strides = [1, 1]} : vector<4x256xf32> to vector<1x256xf32>
    %146 = vector.broadcast %144 : vector<4x1xf32> to vector<4x256xf32>
    %147 = vector.broadcast %145 : vector<1x256xf32> to vector<4x256xf32>
    %148 = arith.mulf %146, %147 : vector<4x256xf32>
    %149 = arith.addf %142, %148 : vector<4x256xf32>
    %150 = vector.extract_strided_slice %5 {offsets = [3, 3, 0, 0], sizes = [1, 1, 4, 1], strides = [1, 1, 1, 1]} : vector<9x4x4x1xf32> to vector<1x1x4x1xf32>
    %151 = vector.shape_cast %150 : vector<1x1x4x1xf32> to vector<4x1xf32>
    %152 = vector.extract_strided_slice %128 {offsets = [3, 0], sizes = [1, 256], strides = [1, 1]} : vector<4x256xf32> to vector<1x256xf32>
    %153 = vector.broadcast %151 : vector<4x1xf32> to vector<4x256xf32>
    %154 = vector.broadcast %152 : vector<1x256xf32> to vector<4x256xf32>
    %155 = arith.mulf %153, %154 : vector<4x256xf32>
    %156 = arith.addf %149, %155 : vector<4x256xf32>
    %157 = vector.extract_strided_slice %5 {offsets = [4, 0, 0, 0], sizes = [1, 1, 4, 1], strides = [1, 1, 1, 1]} : vector<9x4x4x1xf32> to vector<1x1x4x1xf32>
    %158 = vector.shape_cast %157 : vector<1x1x4x1xf32> to vector<4x1xf32>
    %159 = vector.extract_strided_slice %1 {offsets = [0, 0], sizes = [1, 256], strides = [1, 1]} : vector<4x256xf32> to vector<1x256xf32>
    %160 = vector.broadcast %158 : vector<4x1xf32> to vector<4x256xf32>
    %161 = vector.broadcast %159 : vector<1x256xf32> to vector<4x256xf32>
    %162 = arith.mulf %160, %161 : vector<4x256xf32>
    %163 = arith.addf %156, %162 : vector<4x256xf32>
    %164 = vector.extract_strided_slice %5 {offsets = [4, 1, 0, 0], sizes = [1, 1, 4, 1], strides = [1, 1, 1, 1]} : vector<9x4x4x1xf32> to vector<1x1x4x1xf32>
    %165 = vector.shape_cast %164 : vector<1x1x4x1xf32> to vector<4x1xf32>
    %166 = vector.extract_strided_slice %1 {offsets = [1, 0], sizes = [1, 256], strides = [1, 1]} : vector<4x256xf32> to vector<1x256xf32>
    %167 = vector.broadcast %165 : vector<4x1xf32> to vector<4x256xf32>
    %168 = vector.broadcast %166 : vector<1x256xf32> to vector<4x256xf32>
    %169 = arith.mulf %167, %168 : vector<4x256xf32>
    %170 = arith.addf %163, %169 : vector<4x256xf32>
    %171 = vector.extract_strided_slice %5 {offsets = [4, 2, 0, 0], sizes = [1, 1, 4, 1], strides = [1, 1, 1, 1]} : vector<9x4x4x1xf32> to vector<1x1x4x1xf32>
    %172 = vector.shape_cast %171 : vector<1x1x4x1xf32> to vector<4x1xf32>
    %173 = vector.extract_strided_slice %1 {offsets = [2, 0], sizes = [1, 256], strides = [1, 1]} : vector<4x256xf32> to vector<1x256xf32>
    %174 = vector.broadcast %172 : vector<4x1xf32> to vector<4x256xf32>
    %175 = vector.broadcast %173 : vector<1x256xf32> to vector<4x256xf32>
    %176 = arith.mulf %174, %175 : vector<4x256xf32>
    %177 = arith.addf %170, %176 : vector<4x256xf32>
    %178 = vector.extract_strided_slice %5 {offsets = [4, 3, 0, 0], sizes = [1, 1, 4, 1], strides = [1, 1, 1, 1]} : vector<9x4x4x1xf32> to vector<1x1x4x1xf32>
    %179 = vector.shape_cast %178 : vector<1x1x4x1xf32> to vector<4x1xf32>
    %180 = vector.extract_strided_slice %1 {offsets = [3, 0], sizes = [1, 256], strides = [1, 1]} : vector<4x256xf32> to vector<1x256xf32>
    %181 = vector.broadcast %179 : vector<4x1xf32> to vector<4x256xf32>
    %182 = vector.broadcast %180 : vector<1x256xf32> to vector<4x256xf32>
    %183 = arith.mulf %181, %182 : vector<4x256xf32>
    %184 = arith.addf %177, %183 : vector<4x256xf32>
    %c255_i32 = arith.constant 255 : i32
    %185 = tpu.dynamic_rotate %1 by %c255_i32 dim 1 : vector<4x256xf32>, i32 -> vector<4x256xf32>
    %c15_i32_30 = arith.constant 15 : i32
    %186 = vector.broadcast %c15_i32_30 : i32 to vector<1x256xi32>
    %187 = arith.cmpi slt, %4, %186 : vector<1x256xi32>
    %cst_31 = arith.constant 0.000000e+00 : f32
    %188 = vector.shape_cast %187 : vector<1x256xi1> to vector<1x256xi1>
    %189 = vector.broadcast %188 : vector<1x256xi1> to vector<4x256xi1>
    %190 = vector.broadcast %cst_31 : f32 to vector<4x256xf32>
    %191 = arith.select %189, %185, %190 : vector<4x256xi1>, vector<4x256xf32>
    %192 = vector.extract_strided_slice %5 {offsets = [5, 0, 0, 0], sizes = [1, 1, 4, 1], strides = [1, 1, 1, 1]} : vector<9x4x4x1xf32> to vector<1x1x4x1xf32>
    %193 = vector.shape_cast %192 : vector<1x1x4x1xf32> to vector<4x1xf32>
    %194 = vector.extract_strided_slice %191 {offsets = [0, 0], sizes = [1, 256], strides = [1, 1]} : vector<4x256xf32> to vector<1x256xf32>
    %195 = vector.broadcast %193 : vector<4x1xf32> to vector<4x256xf32>
    %196 = vector.broadcast %194 : vector<1x256xf32> to vector<4x256xf32>
    %197 = arith.mulf %195, %196 : vector<4x256xf32>
    %198 = arith.addf %184, %197 : vector<4x256xf32>
    %199 = vector.extract_strided_slice %5 {offsets = [5, 1, 0, 0], sizes = [1, 1, 4, 1], strides = [1, 1, 1, 1]} : vector<9x4x4x1xf32> to vector<1x1x4x1xf32>
    %200 = vector.shape_cast %199 : vector<1x1x4x1xf32> to vector<4x1xf32>
    %201 = vector.extract_strided_slice %191 {offsets = [1, 0], sizes = [1, 256], strides = [1, 1]} : vector<4x256xf32> to vector<1x256xf32>
    %202 = vector.broadcast %200 : vector<4x1xf32> to vector<4x256xf32>
    %203 = vector.broadcast %201 : vector<1x256xf32> to vector<4x256xf32>
    %204 = arith.mulf %202, %203 : vector<4x256xf32>
    %205 = arith.addf %198, %204 : vector<4x256xf32>
    %206 = vector.extract_strided_slice %5 {offsets = [5, 2, 0, 0], sizes = [1, 1, 4, 1], strides = [1, 1, 1, 1]} : vector<9x4x4x1xf32> to vector<1x1x4x1xf32>
    %207 = vector.shape_cast %206 : vector<1x1x4x1xf32> to vector<4x1xf32>
    %208 = vector.extract_strided_slice %191 {offsets = [2, 0], sizes = [1, 256], strides = [1, 1]} : vector<4x256xf32> to vector<1x256xf32>
    %209 = vector.broadcast %207 : vector<4x1xf32> to vector<4x256xf32>
    %210 = vector.broadcast %208 : vector<1x256xf32> to vector<4x256xf32>
    %211 = arith.mulf %209, %210 : vector<4x256xf32>
    %212 = arith.addf %205, %211 : vector<4x256xf32>
    %213 = vector.extract_strided_slice %5 {offsets = [5, 3, 0, 0], sizes = [1, 1, 4, 1], strides = [1, 1, 1, 1]} : vector<9x4x4x1xf32> to vector<1x1x4x1xf32>
    %214 = vector.shape_cast %213 : vector<1x1x4x1xf32> to vector<4x1xf32>
    %215 = vector.extract_strided_slice %191 {offsets = [3, 0], sizes = [1, 256], strides = [1, 1]} : vector<4x256xf32> to vector<1x256xf32>
    %216 = vector.broadcast %214 : vector<4x1xf32> to vector<4x256xf32>
    %217 = vector.broadcast %215 : vector<1x256xf32> to vector<4x256xf32>
    %218 = arith.mulf %216, %217 : vector<4x256xf32>
    %219 = arith.addf %212, %218 : vector<4x256xf32>
    %c241_i32 = arith.constant 241 : i32
    %220 = tpu.dynamic_rotate %1 by %c241_i32 dim 1 : vector<4x256xf32>, i32 -> vector<4x256xf32>
    %c15_i32_32 = arith.constant 15 : i32
    %221 = vector.broadcast %c15_i32_32 : i32 to vector<1x256xi32>
    %222 = arith.cmpi slt, %3, %221 : vector<1x256xi32>
    %c1_i32_33 = arith.constant 1 : i32
    %223 = vector.broadcast %c1_i32_33 : i32 to vector<1x256xi32>
    %224 = arith.cmpi sge, %4, %223 : vector<1x256xi32>
    %225 = arith.andi %222, %224 : vector<1x256xi1>
    %cst_34 = arith.constant 0.000000e+00 : f32
    %226 = vector.shape_cast %225 : vector<1x256xi1> to vector<1x256xi1>
    %227 = vector.broadcast %226 : vector<1x256xi1> to vector<4x256xi1>
    %228 = vector.broadcast %cst_34 : f32 to vector<4x256xf32>
    %229 = arith.select %227, %220, %228 : vector<4x256xi1>, vector<4x256xf32>
    %230 = vector.extract_strided_slice %5 {offsets = [6, 0, 0, 0], sizes = [1, 1, 4, 1], strides = [1, 1, 1, 1]} : vector<9x4x4x1xf32> to vector<1x1x4x1xf32>
    %231 = vector.shape_cast %230 : vector<1x1x4x1xf32> to vector<4x1xf32>
    %232 = vector.extract_strided_slice %229 {offsets = [0, 0], sizes = [1, 256], strides = [1, 1]} : vector<4x256xf32> to vector<1x256xf32>
    %233 = vector.broadcast %231 : vector<4x1xf32> to vector<4x256xf32>
    %234 = vector.broadcast %232 : vector<1x256xf32> to vector<4x256xf32>
    %235 = arith.mulf %233, %234 : vector<4x256xf32>
    %236 = arith.addf %219, %235 : vector<4x256xf32>
    %237 = vector.extract_strided_slice %5 {offsets = [6, 1, 0, 0], sizes = [1, 1, 4, 1], strides = [1, 1, 1, 1]} : vector<9x4x4x1xf32> to vector<1x1x4x1xf32>
    %238 = vector.shape_cast %237 : vector<1x1x4x1xf32> to vector<4x1xf32>
    %239 = vector.extract_strided_slice %229 {offsets = [1, 0], sizes = [1, 256], strides = [1, 1]} : vector<4x256xf32> to vector<1x256xf32>
    %240 = vector.broadcast %238 : vector<4x1xf32> to vector<4x256xf32>
    %241 = vector.broadcast %239 : vector<1x256xf32> to vector<4x256xf32>
    %242 = arith.mulf %240, %241 : vector<4x256xf32>
    %243 = arith.addf %236, %242 : vector<4x256xf32>
    %244 = vector.extract_strided_slice %5 {offsets = [6, 2, 0, 0], sizes = [1, 1, 4, 1], strides = [1, 1, 1, 1]} : vector<9x4x4x1xf32> to vector<1x1x4x1xf32>
    %245 = vector.shape_cast %244 : vector<1x1x4x1xf32> to vector<4x1xf32>
    %246 = vector.extract_strided_slice %229 {offsets = [2, 0], sizes = [1, 256], strides = [1, 1]} : vector<4x256xf32> to vector<1x256xf32>
    %247 = vector.broadcast %245 : vector<4x1xf32> to vector<4x256xf32>
    %248 = vector.broadcast %246 : vector<1x256xf32> to vector<4x256xf32>
    %249 = arith.mulf %247, %248 : vector<4x256xf32>
    %250 = arith.addf %243, %249 : vector<4x256xf32>
    %251 = vector.extract_strided_slice %5 {offsets = [6, 3, 0, 0], sizes = [1, 1, 4, 1], strides = [1, 1, 1, 1]} : vector<9x4x4x1xf32> to vector<1x1x4x1xf32>
    %252 = vector.shape_cast %251 : vector<1x1x4x1xf32> to vector<4x1xf32>
    %253 = vector.extract_strided_slice %229 {offsets = [3, 0], sizes = [1, 256], strides = [1, 1]} : vector<4x256xf32> to vector<1x256xf32>
    %254 = vector.broadcast %252 : vector<4x1xf32> to vector<4x256xf32>
    %255 = vector.broadcast %253 : vector<1x256xf32> to vector<4x256xf32>
    %256 = arith.mulf %254, %255 : vector<4x256xf32>
    %257 = arith.addf %250, %256 : vector<4x256xf32>
    %c240_i32 = arith.constant 240 : i32
    %258 = tpu.dynamic_rotate %1 by %c240_i32 dim 1 : vector<4x256xf32>, i32 -> vector<4x256xf32>
    %c15_i32_35 = arith.constant 15 : i32
    %259 = vector.broadcast %c15_i32_35 : i32 to vector<1x256xi32>
    %260 = arith.cmpi slt, %3, %259 : vector<1x256xi32>
    %cst_36 = arith.constant 0.000000e+00 : f32
    %261 = vector.shape_cast %260 : vector<1x256xi1> to vector<1x256xi1>
    %262 = vector.broadcast %261 : vector<1x256xi1> to vector<4x256xi1>
    %263 = vector.broadcast %cst_36 : f32 to vector<4x256xf32>
    %264 = arith.select %262, %258, %263 : vector<4x256xi1>, vector<4x256xf32>
    %265 = vector.extract_strided_slice %5 {offsets = [7, 0, 0, 0], sizes = [1, 1, 4, 1], strides = [1, 1, 1, 1]} : vector<9x4x4x1xf32> to vector<1x1x4x1xf32>
    %266 = vector.shape_cast %265 : vector<1x1x4x1xf32> to vector<4x1xf32>
    %267 = vector.extract_strided_slice %264 {offsets = [0, 0], sizes = [1, 256], strides = [1, 1]} : vector<4x256xf32> to vector<1x256xf32>
    %268 = vector.broadcast %266 : vector<4x1xf32> to vector<4x256xf32>
    %269 = vector.broadcast %267 : vector<1x256xf32> to vector<4x256xf32>
    %270 = arith.mulf %268, %269 : vector<4x256xf32>
    %271 = arith.addf %257, %270 : vector<4x256xf32>
    %272 = vector.extract_strided_slice %5 {offsets = [7, 1, 0, 0], sizes = [1, 1, 4, 1], strides = [1, 1, 1, 1]} : vector<9x4x4x1xf32> to vector<1x1x4x1xf32>
    %273 = vector.shape_cast %272 : vector<1x1x4x1xf32> to vector<4x1xf32>
    %274 = vector.extract_strided_slice %264 {offsets = [1, 0], sizes = [1, 256], strides = [1, 1]} : vector<4x256xf32> to vector<1x256xf32>
    %275 = vector.broadcast %273 : vector<4x1xf32> to vector<4x256xf32>
    %276 = vector.broadcast %274 : vector<1x256xf32> to vector<4x256xf32>
    %277 = arith.mulf %275, %276 : vector<4x256xf32>
    %278 = arith.addf %271, %277 : vector<4x256xf32>
    %279 = vector.extract_strided_slice %5 {offsets = [7, 2, 0, 0], sizes = [1, 1, 4, 1], strides = [1, 1, 1, 1]} : vector<9x4x4x1xf32> to vector<1x1x4x1xf32>
    %280 = vector.shape_cast %279 : vector<1x1x4x1xf32> to vector<4x1xf32>
    %281 = vector.extract_strided_slice %264 {offsets = [2, 0], sizes = [1, 256], strides = [1, 1]} : vector<4x256xf32> to vector<1x256xf32>
    %282 = vector.broadcast %280 : vector<4x1xf32> to vector<4x256xf32>
    %283 = vector.broadcast %281 : vector<1x256xf32> to vector<4x256xf32>
    %284 = arith.mulf %282, %283 : vector<4x256xf32>
    %285 = arith.addf %278, %284 : vector<4x256xf32>
    %286 = vector.extract_strided_slice %5 {offsets = [7, 3, 0, 0], sizes = [1, 1, 4, 1], strides = [1, 1, 1, 1]} : vector<9x4x4x1xf32> to vector<1x1x4x1xf32>
    %287 = vector.shape_cast %286 : vector<1x1x4x1xf32> to vector<4x1xf32>
    %288 = vector.extract_strided_slice %264 {offsets = [3, 0], sizes = [1, 256], strides = [1, 1]} : vector<4x256xf32> to vector<1x256xf32>
    %289 = vector.broadcast %287 : vector<4x1xf32> to vector<4x256xf32>
    %290 = vector.broadcast %288 : vector<1x256xf32> to vector<4x256xf32>
    %291 = arith.mulf %289, %290 : vector<4x256xf32>
    %292 = arith.addf %285, %291 : vector<4x256xf32>
    %c239_i32 = arith.constant 239 : i32
    %293 = tpu.dynamic_rotate %1 by %c239_i32 dim 1 : vector<4x256xf32>, i32 -> vector<4x256xf32>
    %c15_i32_37 = arith.constant 15 : i32
    %294 = vector.broadcast %c15_i32_37 : i32 to vector<1x256xi32>
    %295 = arith.cmpi slt, %3, %294 : vector<1x256xi32>
    %c15_i32_38 = arith.constant 15 : i32
    %296 = vector.broadcast %c15_i32_38 : i32 to vector<1x256xi32>
    %297 = arith.cmpi slt, %4, %296 : vector<1x256xi32>
    %298 = arith.andi %295, %297 : vector<1x256xi1>
    %cst_39 = arith.constant 0.000000e+00 : f32
    %299 = vector.shape_cast %298 : vector<1x256xi1> to vector<1x256xi1>
    %300 = vector.broadcast %299 : vector<1x256xi1> to vector<4x256xi1>
    %301 = vector.broadcast %cst_39 : f32 to vector<4x256xf32>
    %302 = arith.select %300, %293, %301 : vector<4x256xi1>, vector<4x256xf32>
    %303 = vector.extract_strided_slice %5 {offsets = [8, 0, 0, 0], sizes = [1, 1, 4, 1], strides = [1, 1, 1, 1]} : vector<9x4x4x1xf32> to vector<1x1x4x1xf32>
    %304 = vector.shape_cast %303 : vector<1x1x4x1xf32> to vector<4x1xf32>
    %305 = vector.extract_strided_slice %302 {offsets = [0, 0], sizes = [1, 256], strides = [1, 1]} : vector<4x256xf32> to vector<1x256xf32>
    %306 = vector.broadcast %304 : vector<4x1xf32> to vector<4x256xf32>
    %307 = vector.broadcast %305 : vector<1x256xf32> to vector<4x256xf32>
    %308 = arith.mulf %306, %307 : vector<4x256xf32>
    %309 = arith.addf %292, %308 : vector<4x256xf32>
    %310 = vector.extract_strided_slice %5 {offsets = [8, 1, 0, 0], sizes = [1, 1, 4, 1], strides = [1, 1, 1, 1]} : vector<9x4x4x1xf32> to vector<1x1x4x1xf32>
    %311 = vector.shape_cast %310 : vector<1x1x4x1xf32> to vector<4x1xf32>
    %312 = vector.extract_strided_slice %302 {offsets = [1, 0], sizes = [1, 256], strides = [1, 1]} : vector<4x256xf32> to vector<1x256xf32>
    %313 = vector.broadcast %311 : vector<4x1xf32> to vector<4x256xf32>
    %314 = vector.broadcast %312 : vector<1x256xf32> to vector<4x256xf32>
    %315 = arith.mulf %313, %314 : vector<4x256xf32>
    %316 = arith.addf %309, %315 : vector<4x256xf32>
    %317 = vector.extract_strided_slice %5 {offsets = [8, 2, 0, 0], sizes = [1, 1, 4, 1], strides = [1, 1, 1, 1]} : vector<9x4x4x1xf32> to vector<1x1x4x1xf32>
    %318 = vector.shape_cast %317 : vector<1x1x4x1xf32> to vector<4x1xf32>
    %319 = vector.extract_strided_slice %302 {offsets = [2, 0], sizes = [1, 256], strides = [1, 1]} : vector<4x256xf32> to vector<1x256xf32>
    %320 = vector.broadcast %318 : vector<4x1xf32> to vector<4x256xf32>
    %321 = vector.broadcast %319 : vector<1x256xf32> to vector<4x256xf32>
    %322 = arith.mulf %320, %321 : vector<4x256xf32>
    %323 = arith.addf %316, %322 : vector<4x256xf32>
    %324 = vector.extract_strided_slice %5 {offsets = [8, 3, 0, 0], sizes = [1, 1, 4, 1], strides = [1, 1, 1, 1]} : vector<9x4x4x1xf32> to vector<1x1x4x1xf32>
    %325 = vector.shape_cast %324 : vector<1x1x4x1xf32> to vector<4x1xf32>
    %326 = vector.extract_strided_slice %302 {offsets = [3, 0], sizes = [1, 256], strides = [1, 1]} : vector<4x256xf32> to vector<1x256xf32>
    %327 = vector.broadcast %325 : vector<4x1xf32> to vector<4x256xf32>
    %328 = vector.broadcast %326 : vector<1x256xf32> to vector<4x256xf32>
    %329 = arith.mulf %327, %328 : vector<4x256xf32>
    %330 = arith.addf %323, %329 : vector<4x256xf32>
    %c0_40 = arith.constant 0 : index
    %c0_41 = arith.constant 0 : index
    %331 = vector.load %arg4[%c0_40, %c0_41] : memref<4x1xf32, #tpu.memory_space<vmem>>, vector<4x1xf32>
    %332 = vector.broadcast %331 : vector<4x1xf32> to vector<4x256xf32>
    %333 = arith.addf %330, %332 : vector<4x256xf32>
    %c0_i32 = arith.constant 0 : i32
    %334 = vector.broadcast %c0_i32 : i32 to vector<1x256xi32>
    %335 = arith.cmpi eq, %3, %334 : vector<1x256xi32>
    %c15_i32_42 = arith.constant 15 : i32
    %336 = vector.broadcast %c15_i32_42 : i32 to vector<1x256xi32>
    %337 = arith.cmpi eq, %3, %336 : vector<1x256xi32>
    %338 = arith.ori %335, %337 : vector<1x256xi1>
    %c0_i32_43 = arith.constant 0 : i32
    %339 = vector.broadcast %c0_i32_43 : i32 to vector<1x256xi32>
    %340 = arith.cmpi eq, %4, %339 : vector<1x256xi32>
    %c15_i32_44 = arith.constant 15 : i32
    %341 = vector.broadcast %c15_i32_44 : i32 to vector<1x256xi32>
    %342 = arith.cmpi eq, %4, %341 : vector<1x256xi32>
    %343 = arith.ori %340, %342 : vector<1x256xi1>
    %344 = tpu.iota {dimensions = array<i32: 0>} : vector<4x1xi32>
    %c2_i32 = arith.constant 2 : i32
    %345 = vector.broadcast %c2_i32 : i32 to vector<4x1xi32>
    %346 = arith.cmpi slt, %344, %345 : vector<4x1xi32>
    %347 = vector.broadcast %346 : vector<4x1xi1> to vector<4x256xi1>
    %348 = vector.broadcast %338 : vector<1x256xi1> to vector<4x256xi1>
    %349 = arith.andi %347, %348 : vector<4x256xi1>
    %cst_45 = arith.constant dense<true> : vector<4x1xi1>
    %350 = arith.xori %346, %cst_45 : vector<4x1xi1>
    %351 = vector.broadcast %350 : vector<4x1xi1> to vector<4x256xi1>
    %352 = vector.broadcast %343 : vector<1x256xi1> to vector<4x256xi1>
    %353 = arith.andi %351, %352 : vector<4x256xi1>
    %354 = arith.ori %349, %353 : vector<4x256xi1>
    %c0_46 = arith.constant 0 : index
    %c0_47 = arith.constant 0 : index
    %355 = vector.load %arg5[%c0_46, %c0_47] : memref<4x1xf32, #tpu.memory_space<vmem>>, vector<4x1xf32>
    %356 = vector.shape_cast %355 : vector<4x1xf32> to vector<4x1xf32>
    %357 = vector.broadcast %356 : vector<4x1xf32> to vector<4x256xf32>
    %358 = arith.select %354, %357, %333 : vector<4x256xi1>, vector<4x256xf32>
    %cst_48 = arith.constant 0.000000e+00 : f32
    %359 = vector.broadcast %cst_48 : f32 to vector<4x256xf32>
    %360 = vector.extract_strided_slice %6 {offsets = [0, 0, 0], sizes = [1, 4, 1], strides = [1, 1, 1]} : vector<9x4x1xf32> to vector<1x4x1xf32>
    %361 = vector.shape_cast %360 : vector<1x4x1xf32> to vector<4x1xf32>
    %c34_i32 = arith.constant 34 : i32
    %362 = tpu.dynamic_rotate %358 by %c34_i32 dim 1 : vector<4x256xf32>, i32 -> vector<4x256xf32>
    %c2_i32_49 = arith.constant 2 : i32
    %363 = vector.broadcast %c2_i32_49 : i32 to vector<1x256xi32>
    %364 = arith.cmpi sge, %3, %363 : vector<1x256xi32>
    %c2_i32_50 = arith.constant 2 : i32
    %365 = vector.broadcast %c2_i32_50 : i32 to vector<1x256xi32>
    %366 = arith.cmpi sge, %4, %365 : vector<1x256xi32>
    %367 = arith.andi %364, %366 : vector<1x256xi1>
    %cst_51 = arith.constant 0.000000e+00 : f32
    %368 = vector.shape_cast %367 : vector<1x256xi1> to vector<1x256xi1>
    %369 = vector.broadcast %368 : vector<1x256xi1> to vector<4x256xi1>
    %370 = vector.broadcast %cst_51 : f32 to vector<4x256xf32>
    %371 = arith.select %369, %362, %370 : vector<4x256xi1>, vector<4x256xf32>
    %372 = vector.broadcast %361 : vector<4x1xf32> to vector<4x256xf32>
    %373 = arith.mulf %372, %371 : vector<4x256xf32>
    %374 = arith.addf %359, %373 : vector<4x256xf32>
    %375 = vector.extract_strided_slice %6 {offsets = [1, 0, 0], sizes = [1, 4, 1], strides = [1, 1, 1]} : vector<9x4x1xf32> to vector<1x4x1xf32>
    %376 = vector.shape_cast %375 : vector<1x4x1xf32> to vector<4x1xf32>
    %c32_i32 = arith.constant 32 : i32
    %377 = tpu.dynamic_rotate %358 by %c32_i32 dim 1 : vector<4x256xf32>, i32 -> vector<4x256xf32>
    %c2_i32_52 = arith.constant 2 : i32
    %378 = vector.broadcast %c2_i32_52 : i32 to vector<1x256xi32>
    %379 = arith.cmpi sge, %3, %378 : vector<1x256xi32>
    %cst_53 = arith.constant 0.000000e+00 : f32
    %380 = vector.shape_cast %379 : vector<1x256xi1> to vector<1x256xi1>
    %381 = vector.broadcast %380 : vector<1x256xi1> to vector<4x256xi1>
    %382 = vector.broadcast %cst_53 : f32 to vector<4x256xf32>
    %383 = arith.select %381, %377, %382 : vector<4x256xi1>, vector<4x256xf32>
    %384 = vector.broadcast %376 : vector<4x1xf32> to vector<4x256xf32>
    %385 = arith.mulf %384, %383 : vector<4x256xf32>
    %386 = arith.addf %374, %385 : vector<4x256xf32>
    %387 = vector.extract_strided_slice %6 {offsets = [2, 0, 0], sizes = [1, 4, 1], strides = [1, 1, 1]} : vector<9x4x1xf32> to vector<1x4x1xf32>
    %388 = vector.shape_cast %387 : vector<1x4x1xf32> to vector<4x1xf32>
    %c30_i32 = arith.constant 30 : i32
    %389 = tpu.dynamic_rotate %358 by %c30_i32 dim 1 : vector<4x256xf32>, i32 -> vector<4x256xf32>
    %c2_i32_54 = arith.constant 2 : i32
    %390 = vector.broadcast %c2_i32_54 : i32 to vector<1x256xi32>
    %391 = arith.cmpi sge, %3, %390 : vector<1x256xi32>
    %c14_i32 = arith.constant 14 : i32
    %392 = vector.broadcast %c14_i32 : i32 to vector<1x256xi32>
    %393 = arith.cmpi slt, %4, %392 : vector<1x256xi32>
    %394 = arith.andi %391, %393 : vector<1x256xi1>
    %cst_55 = arith.constant 0.000000e+00 : f32
    %395 = vector.shape_cast %394 : vector<1x256xi1> to vector<1x256xi1>
    %396 = vector.broadcast %395 : vector<1x256xi1> to vector<4x256xi1>
    %397 = vector.broadcast %cst_55 : f32 to vector<4x256xf32>
    %398 = arith.select %396, %389, %397 : vector<4x256xi1>, vector<4x256xf32>
    %399 = vector.broadcast %388 : vector<4x1xf32> to vector<4x256xf32>
    %400 = arith.mulf %399, %398 : vector<4x256xf32>
    %401 = arith.addf %386, %400 : vector<4x256xf32>
    %402 = vector.extract_strided_slice %6 {offsets = [3, 0, 0], sizes = [1, 4, 1], strides = [1, 1, 1]} : vector<9x4x1xf32> to vector<1x4x1xf32>
    %403 = vector.shape_cast %402 : vector<1x4x1xf32> to vector<4x1xf32>
    %c2_i32_56 = arith.constant 2 : i32
    %404 = tpu.dynamic_rotate %358 by %c2_i32_56 dim 1 : vector<4x256xf32>, i32 -> vector<4x256xf32>
    %c2_i32_57 = arith.constant 2 : i32
    %405 = vector.broadcast %c2_i32_57 : i32 to vector<1x256xi32>
    %406 = arith.cmpi sge, %4, %405 : vector<1x256xi32>
    %cst_58 = arith.constant 0.000000e+00 : f32
    %407 = vector.shape_cast %406 : vector<1x256xi1> to vector<1x256xi1>
    %408 = vector.broadcast %407 : vector<1x256xi1> to vector<4x256xi1>
    %409 = vector.broadcast %cst_58 : f32 to vector<4x256xf32>
    %410 = arith.select %408, %404, %409 : vector<4x256xi1>, vector<4x256xf32>
    %411 = vector.broadcast %403 : vector<4x1xf32> to vector<4x256xf32>
    %412 = arith.mulf %411, %410 : vector<4x256xf32>
    %413 = arith.addf %401, %412 : vector<4x256xf32>
    %414 = vector.extract_strided_slice %6 {offsets = [4, 0, 0], sizes = [1, 4, 1], strides = [1, 1, 1]} : vector<9x4x1xf32> to vector<1x4x1xf32>
    %415 = vector.shape_cast %414 : vector<1x4x1xf32> to vector<4x1xf32>
    %416 = vector.broadcast %415 : vector<4x1xf32> to vector<4x256xf32>
    %417 = arith.mulf %416, %358 : vector<4x256xf32>
    %418 = arith.addf %413, %417 : vector<4x256xf32>
    %419 = vector.extract_strided_slice %6 {offsets = [5, 0, 0], sizes = [1, 4, 1], strides = [1, 1, 1]} : vector<9x4x1xf32> to vector<1x4x1xf32>
    %420 = vector.shape_cast %419 : vector<1x4x1xf32> to vector<4x1xf32>
    %c254_i32 = arith.constant 254 : i32
    %421 = tpu.dynamic_rotate %358 by %c254_i32 dim 1 : vector<4x256xf32>, i32 -> vector<4x256xf32>
    %c14_i32_59 = arith.constant 14 : i32
    %422 = vector.broadcast %c14_i32_59 : i32 to vector<1x256xi32>
    %423 = arith.cmpi slt, %4, %422 : vector<1x256xi32>
    %cst_60 = arith.constant 0.000000e+00 : f32
    %424 = vector.shape_cast %423 : vector<1x256xi1> to vector<1x256xi1>
    %425 = vector.broadcast %424 : vector<1x256xi1> to vector<4x256xi1>
    %426 = vector.broadcast %cst_60 : f32 to vector<4x256xf32>
    %427 = arith.select %425, %421, %426 : vector<4x256xi1>, vector<4x256xf32>
    %428 = vector.broadcast %420 : vector<4x1xf32> to vector<4x256xf32>
    %429 = arith.mulf %428, %427 : vector<4x256xf32>
    %430 = arith.addf %418, %429 : vector<4x256xf32>
    %431 = vector.extract_strided_slice %6 {offsets = [6, 0, 0], sizes = [1, 4, 1], strides = [1, 1, 1]} : vector<9x4x1xf32> to vector<1x4x1xf32>
    %432 = vector.shape_cast %431 : vector<1x4x1xf32> to vector<4x1xf32>
    %c226_i32 = arith.constant 226 : i32
    %433 = tpu.dynamic_rotate %358 by %c226_i32 dim 1 : vector<4x256xf32>, i32 -> vector<4x256xf32>
    %c14_i32_61 = arith.constant 14 : i32
    %434 = vector.broadcast %c14_i32_61 : i32 to vector<1x256xi32>
    %435 = arith.cmpi slt, %3, %434 : vector<1x256xi32>
    %c2_i32_62 = arith.constant 2 : i32
    %436 = vector.broadcast %c2_i32_62 : i32 to vector<1x256xi32>
    %437 = arith.cmpi sge, %4, %436 : vector<1x256xi32>
    %438 = arith.andi %435, %437 : vector<1x256xi1>
    %cst_63 = arith.constant 0.000000e+00 : f32
    %439 = vector.shape_cast %438 : vector<1x256xi1> to vector<1x256xi1>
    %440 = vector.broadcast %439 : vector<1x256xi1> to vector<4x256xi1>
    %441 = vector.broadcast %cst_63 : f32 to vector<4x256xf32>
    %442 = arith.select %440, %433, %441 : vector<4x256xi1>, vector<4x256xf32>
    %443 = vector.broadcast %432 : vector<4x1xf32> to vector<4x256xf32>
    %444 = arith.mulf %443, %442 : vector<4x256xf32>
    %445 = arith.addf %430, %444 : vector<4x256xf32>
    %446 = vector.extract_strided_slice %6 {offsets = [7, 0, 0], sizes = [1, 4, 1], strides = [1, 1, 1]} : vector<9x4x1xf32> to vector<1x4x1xf32>
    %447 = vector.shape_cast %446 : vector<1x4x1xf32> to vector<4x1xf32>
    %c224_i32 = arith.constant 224 : i32
    %448 = tpu.dynamic_rotate %358 by %c224_i32 dim 1 : vector<4x256xf32>, i32 -> vector<4x256xf32>
    %c14_i32_64 = arith.constant 14 : i32
    %449 = vector.broadcast %c14_i32_64 : i32 to vector<1x256xi32>
    %450 = arith.cmpi slt, %3, %449 : vector<1x256xi32>
    %cst_65 = arith.constant 0.000000e+00 : f32
    %451 = vector.shape_cast %450 : vector<1x256xi1> to vector<1x256xi1>
    %452 = vector.broadcast %451 : vector<1x256xi1> to vector<4x256xi1>
    %453 = vector.broadcast %cst_65 : f32 to vector<4x256xf32>
    %454 = arith.select %452, %448, %453 : vector<4x256xi1>, vector<4x256xf32>
    %455 = vector.broadcast %447 : vector<4x1xf32> to vector<4x256xf32>
    %456 = arith.mulf %455, %454 : vector<4x256xf32>
    %457 = arith.addf %445, %456 : vector<4x256xf32>
    %458 = vector.extract_strided_slice %6 {offsets = [8, 0, 0], sizes = [1, 4, 1], strides = [1, 1, 1]} : vector<9x4x1xf32> to vector<1x4x1xf32>
    %459 = vector.shape_cast %458 : vector<1x4x1xf32> to vector<4x1xf32>
    %c222_i32 = arith.constant 222 : i32
    %460 = tpu.dynamic_rotate %358 by %c222_i32 dim 1 : vector<4x256xf32>, i32 -> vector<4x256xf32>
    %c14_i32_66 = arith.constant 14 : i32
    %461 = vector.broadcast %c14_i32_66 : i32 to vector<1x256xi32>
    %462 = arith.cmpi slt, %3, %461 : vector<1x256xi32>
    %c14_i32_67 = arith.constant 14 : i32
    %463 = vector.broadcast %c14_i32_67 : i32 to vector<1x256xi32>
    %464 = arith.cmpi slt, %4, %463 : vector<1x256xi32>
    %465 = arith.andi %462, %464 : vector<1x256xi1>
    %cst_68 = arith.constant 0.000000e+00 : f32
    %466 = vector.shape_cast %465 : vector<1x256xi1> to vector<1x256xi1>
    %467 = vector.broadcast %466 : vector<1x256xi1> to vector<4x256xi1>
    %468 = vector.broadcast %cst_68 : f32 to vector<4x256xf32>
    %469 = arith.select %467, %460, %468 : vector<4x256xi1>, vector<4x256xf32>
    %470 = vector.broadcast %459 : vector<4x1xf32> to vector<4x256xf32>
    %471 = arith.mulf %470, %469 : vector<4x256xf32>
    %472 = arith.addf %457, %471 : vector<4x256xf32>
    %cst_69 = arith.constant 0.000000e+00 : f32
    %473 = vector.broadcast %cst_69 : f32 to vector<4x256xf32>
    %474 = vector.extract_strided_slice %7 {offsets = [0, 0, 0], sizes = [1, 4, 1], strides = [1, 1, 1]} : vector<4x4x1xf32> to vector<1x4x1xf32>
    %475 = vector.shape_cast %474 : vector<1x4x1xf32> to vector<4x1xf32>
    %476 = vector.extract_strided_slice %472 {offsets = [0, 0], sizes = [1, 256], strides = [1, 1]} : vector<4x256xf32> to vector<1x256xf32>
    %477 = vector.broadcast %475 : vector<4x1xf32> to vector<4x256xf32>
    %478 = vector.broadcast %476 : vector<1x256xf32> to vector<4x256xf32>
    %479 = arith.mulf %477, %478 : vector<4x256xf32>
    %480 = arith.addf %473, %479 : vector<4x256xf32>
    %481 = vector.extract_strided_slice %7 {offsets = [1, 0, 0], sizes = [1, 4, 1], strides = [1, 1, 1]} : vector<4x4x1xf32> to vector<1x4x1xf32>
    %482 = vector.shape_cast %481 : vector<1x4x1xf32> to vector<4x1xf32>
    %483 = vector.extract_strided_slice %472 {offsets = [1, 0], sizes = [1, 256], strides = [1, 1]} : vector<4x256xf32> to vector<1x256xf32>
    %484 = vector.broadcast %482 : vector<4x1xf32> to vector<4x256xf32>
    %485 = vector.broadcast %483 : vector<1x256xf32> to vector<4x256xf32>
    %486 = arith.mulf %484, %485 : vector<4x256xf32>
    %487 = arith.addf %480, %486 : vector<4x256xf32>
    %488 = vector.extract_strided_slice %7 {offsets = [2, 0, 0], sizes = [1, 4, 1], strides = [1, 1, 1]} : vector<4x4x1xf32> to vector<1x4x1xf32>
    %489 = vector.shape_cast %488 : vector<1x4x1xf32> to vector<4x1xf32>
    %490 = vector.extract_strided_slice %472 {offsets = [2, 0], sizes = [1, 256], strides = [1, 1]} : vector<4x256xf32> to vector<1x256xf32>
    %491 = vector.broadcast %489 : vector<4x1xf32> to vector<4x256xf32>
    %492 = vector.broadcast %490 : vector<1x256xf32> to vector<4x256xf32>
    %493 = arith.mulf %491, %492 : vector<4x256xf32>
    %494 = arith.addf %487, %493 : vector<4x256xf32>
    %495 = vector.extract_strided_slice %7 {offsets = [3, 0, 0], sizes = [1, 4, 1], strides = [1, 1, 1]} : vector<4x4x1xf32> to vector<1x4x1xf32>
    %496 = vector.shape_cast %495 : vector<1x4x1xf32> to vector<4x1xf32>
    %497 = vector.extract_strided_slice %472 {offsets = [3, 0], sizes = [1, 256], strides = [1, 1]} : vector<4x256xf32> to vector<1x256xf32>
    %498 = vector.broadcast %496 : vector<4x1xf32> to vector<4x256xf32>
    %499 = vector.broadcast %497 : vector<1x256xf32> to vector<4x256xf32>
    %500 = arith.mulf %498, %499 : vector<4x256xf32>
    %501 = arith.addf %494, %500 : vector<4x256xf32>
    %c0_70 = arith.constant 0 : index
    %c0_71 = arith.constant 0 : index
    %502 = vector.load %arg8[%c0_70, %c0_71] : memref<4x1xf32, #tpu.memory_space<vmem>>, vector<4x1xf32>
    %503 = vector.broadcast %502 : vector<4x1xf32> to vector<4x256xf32>
    %504 = arith.addf %501, %503 : vector<4x256xf32>
    %cst_72 = arith.constant 0.000000e+00 : f32
    %505 = vector.broadcast %cst_72 : f32 to vector<4x256xf32>
    %506 = arith.maximumf %504, %505 : vector<4x256xf32>
    %cst_73 = arith.constant 0.000000e+00 : f32
    %507 = vector.broadcast %cst_73 : f32 to vector<4x256xf32>
    %508 = vector.extract_strided_slice %8 {offsets = [0, 0, 0], sizes = [1, 4, 1], strides = [1, 1, 1]} : vector<4x4x1xf32> to vector<1x4x1xf32>
    %509 = vector.shape_cast %508 : vector<1x4x1xf32> to vector<4x1xf32>
    %510 = vector.extract_strided_slice %506 {offsets = [0, 0], sizes = [1, 256], strides = [1, 1]} : vector<4x256xf32> to vector<1x256xf32>
    %511 = vector.broadcast %509 : vector<4x1xf32> to vector<4x256xf32>
    %512 = vector.broadcast %510 : vector<1x256xf32> to vector<4x256xf32>
    %513 = arith.mulf %511, %512 : vector<4x256xf32>
    %514 = arith.addf %507, %513 : vector<4x256xf32>
    %515 = vector.extract_strided_slice %9 {offsets = [0, 0, 0], sizes = [1, 4, 1], strides = [1, 1, 1]} : vector<4x4x1xf32> to vector<1x4x1xf32>
    %516 = vector.shape_cast %515 : vector<1x4x1xf32> to vector<4x1xf32>
    %517 = vector.extract_strided_slice %1 {offsets = [0, 0], sizes = [1, 256], strides = [1, 1]} : vector<4x256xf32> to vector<1x256xf32>
    %518 = vector.broadcast %516 : vector<4x1xf32> to vector<4x256xf32>
    %519 = vector.broadcast %517 : vector<1x256xf32> to vector<4x256xf32>
    %520 = arith.mulf %518, %519 : vector<4x256xf32>
    %521 = arith.addf %514, %520 : vector<4x256xf32>
    %522 = vector.extract_strided_slice %8 {offsets = [1, 0, 0], sizes = [1, 4, 1], strides = [1, 1, 1]} : vector<4x4x1xf32> to vector<1x4x1xf32>
    %523 = vector.shape_cast %522 : vector<1x4x1xf32> to vector<4x1xf32>
    %524 = vector.extract_strided_slice %506 {offsets = [1, 0], sizes = [1, 256], strides = [1, 1]} : vector<4x256xf32> to vector<1x256xf32>
    %525 = vector.broadcast %523 : vector<4x1xf32> to vector<4x256xf32>
    %526 = vector.broadcast %524 : vector<1x256xf32> to vector<4x256xf32>
    %527 = arith.mulf %525, %526 : vector<4x256xf32>
    %528 = arith.addf %521, %527 : vector<4x256xf32>
    %529 = vector.extract_strided_slice %9 {offsets = [1, 0, 0], sizes = [1, 4, 1], strides = [1, 1, 1]} : vector<4x4x1xf32> to vector<1x4x1xf32>
    %530 = vector.shape_cast %529 : vector<1x4x1xf32> to vector<4x1xf32>
    %531 = vector.extract_strided_slice %1 {offsets = [1, 0], sizes = [1, 256], strides = [1, 1]} : vector<4x256xf32> to vector<1x256xf32>
    %532 = vector.broadcast %530 : vector<4x1xf32> to vector<4x256xf32>
    %533 = vector.broadcast %531 : vector<1x256xf32> to vector<4x256xf32>
    %534 = arith.mulf %532, %533 : vector<4x256xf32>
    %535 = arith.addf %528, %534 : vector<4x256xf32>
    %536 = vector.extract_strided_slice %8 {offsets = [2, 0, 0], sizes = [1, 4, 1], strides = [1, 1, 1]} : vector<4x4x1xf32> to vector<1x4x1xf32>
    %537 = vector.shape_cast %536 : vector<1x4x1xf32> to vector<4x1xf32>
    %538 = vector.extract_strided_slice %506 {offsets = [2, 0], sizes = [1, 256], strides = [1, 1]} : vector<4x256xf32> to vector<1x256xf32>
    %539 = vector.broadcast %537 : vector<4x1xf32> to vector<4x256xf32>
    %540 = vector.broadcast %538 : vector<1x256xf32> to vector<4x256xf32>
    %541 = arith.mulf %539, %540 : vector<4x256xf32>
    %542 = arith.addf %535, %541 : vector<4x256xf32>
    %543 = vector.extract_strided_slice %9 {offsets = [2, 0, 0], sizes = [1, 4, 1], strides = [1, 1, 1]} : vector<4x4x1xf32> to vector<1x4x1xf32>
    %544 = vector.shape_cast %543 : vector<1x4x1xf32> to vector<4x1xf32>
    %545 = vector.extract_strided_slice %1 {offsets = [2, 0], sizes = [1, 256], strides = [1, 1]} : vector<4x256xf32> to vector<1x256xf32>
    %546 = vector.broadcast %544 : vector<4x1xf32> to vector<4x256xf32>
    %547 = vector.broadcast %545 : vector<1x256xf32> to vector<4x256xf32>
    %548 = arith.mulf %546, %547 : vector<4x256xf32>
    %549 = arith.addf %542, %548 : vector<4x256xf32>
    %550 = vector.extract_strided_slice %8 {offsets = [3, 0, 0], sizes = [1, 4, 1], strides = [1, 1, 1]} : vector<4x4x1xf32> to vector<1x4x1xf32>
    %551 = vector.shape_cast %550 : vector<1x4x1xf32> to vector<4x1xf32>
    %552 = vector.extract_strided_slice %506 {offsets = [3, 0], sizes = [1, 256], strides = [1, 1]} : vector<4x256xf32> to vector<1x256xf32>
    %553 = vector.broadcast %551 : vector<4x1xf32> to vector<4x256xf32>
    %554 = vector.broadcast %552 : vector<1x256xf32> to vector<4x256xf32>
    %555 = arith.mulf %553, %554 : vector<4x256xf32>
    %556 = arith.addf %549, %555 : vector<4x256xf32>
    %557 = vector.extract_strided_slice %9 {offsets = [3, 0, 0], sizes = [1, 4, 1], strides = [1, 1, 1]} : vector<4x4x1xf32> to vector<1x4x1xf32>
    %558 = vector.shape_cast %557 : vector<1x4x1xf32> to vector<4x1xf32>
    %559 = vector.extract_strided_slice %1 {offsets = [3, 0], sizes = [1, 256], strides = [1, 1]} : vector<4x256xf32> to vector<1x256xf32>
    %560 = vector.broadcast %558 : vector<4x1xf32> to vector<4x256xf32>
    %561 = vector.broadcast %559 : vector<1x256xf32> to vector<4x256xf32>
    %562 = arith.mulf %560, %561 : vector<4x256xf32>
    %563 = arith.addf %556, %562 : vector<4x256xf32>
    %cst_74 = arith.constant 0.000000e+00 : f32
    %564 = vector.broadcast %cst_74 : f32 to vector<4x256xf32>
    %565 = arith.maximumf %563, %564 : vector<4x256xf32>
    %c0_75 = arith.constant 0 : index
    %c0_76 = arith.constant 0 : index
    %c0_77 = arith.constant 0 : index
    %566 = vector.load %arg11[%c0_75, %c0_76, %c0_77] : memref<1x4x256xf32, #tpu.memory_space<vmem>>, vector<1x4x256xf32>
    %567 = vector.shape_cast %566 : vector<1x4x256xf32> to vector<4x256xf32>
    %568 = vector.shape_cast %565 : vector<4x256xf32> to vector<1x4x256xf32>
    tpu.vector_store %arg11[%c0_75, %c0_76, %c0_77], %568 {strides = array<i32>} : memref<1x4x256xf32, #tpu.memory_space<vmem>>, vector<1x4x256xf32>,
    return
  }
  func.func @transform_0(%arg0: i32) -> (i32, i32, i32) {
    %c0_i32 = arith.constant 0 : i32
    %c0_i32_0 = arith.constant 0 : i32
    %c0_i32_1 = arith.constant 0 : i32
    return %arg0, %c0_i32, %c0_i32_0 : i32, i32, i32
  }
  func.func @transform_1(%arg0: i32) -> (i32, i32) {
    %c0_i32 = arith.constant 0 : i32
    %c0_i32_0 = arith.constant 0 : i32
    %c0_i32_1 = arith.constant 0 : i32
    return %c0_i32, %c0_i32_0 : i32, i32
  }
  func.func @transform_2(%arg0: i32) -> (i32, i32, i32, i32) {
    %c0_i32 = arith.constant 0 : i32
    %c0_i32_0 = arith.constant 0 : i32
    %c0_i32_1 = arith.constant 0 : i32
    %c0_i32_2 = arith.constant 0 : i32
    %c0_i32_3 = arith.constant 0 : i32
    return %c0_i32, %c0_i32_0, %c0_i32_1, %c0_i32_2 : i32, i32, i32, i32
  }
  func.func @transform_3(%arg0: i32) -> (i32, i32) {
    %c0_i32 = arith.constant 0 : i32
    %c0_i32_0 = arith.constant 0 : i32
    %c0_i32_1 = arith.constant 0 : i32
    return %c0_i32, %c0_i32_0 : i32, i32
  }
  func.func @transform_4(%arg0: i32) -> (i32, i32) {
    %c0_i32 = arith.constant 0 : i32
    %c0_i32_0 = arith.constant 0 : i32
    %c0_i32_1 = arith.constant 0 : i32
    return %c0_i32, %c0_i32_0 : i32, i32
  }
  func.func @transform_5(%arg0: i32) -> (i32, i32, i32) {
    %c0_i32 = arith.constant 0 : i32
    %c0_i32_0 = arith.constant 0 : i32
    %c0_i32_1 = arith.constant 0 : i32
    %c0_i32_2 = arith.constant 0 : i32
    return %c0_i32, %c0_i32_0, %c0_i32_1 : i32, i32, i32
  }
  func.func @transform_6(%arg0: i32) -> (i32, i32, i32) {
    %c0_i32 = arith.constant 0 : i32
    %c0_i32_0 = arith.constant 0 : i32
    %c0_i32_1 = arith.constant 0 : i32
    %c0_i32_2 = arith.constant 0 : i32
    return %c0_i32, %c0_i32_0, %c0_i32_1 : i32, i32, i32
  }
  func.func @transform_7(%arg0: i32) -> (i32, i32) {
    %c0_i32 = arith.constant 0 : i32
    %c0_i32_0 = arith.constant 0 : i32
    %c0_i32_1 = arith.constant 0 : i32
    return %c0_i32, %c0_i32_0 : i32, i32
  }
  func.func @transform_8(%arg0: i32) -> (i32, i32, i32) {
    %c0_i32 = arith.constant 0 : i32
    %c0_i32_0 = arith.constant 0 : i32
    %c0_i32_1 = arith.constant 0 : i32
    %c0_i32_2 = arith.constant 0 : i32
    return %c0_i32, %c0_i32_0, %c0_i32_1 : i32, i32, i32
  }
  func.func @transform_9(%arg0: i32) -> (i32, i32, i32) {
    %c0_i32 = arith.constant 0 : i32
    %c0_i32_0 = arith.constant 0 : i32
    %c0_i32_1 = arith.constant 0 : i32
    %c0_i32_2 = arith.constant 0 : i32
    return %c0_i32, %c0_i32_0, %c0_i32_1 : i32, i32, i32
  }
  func.func @transform_10(%arg0: i32) -> (i32, i32, i32) {
    %c0_i32 = arith.constant 0 : i32
    %c0_i32_0 = arith.constant 0 : i32
    %c0_i32_1 = arith.constant 0 : i32
    return %arg0, %c0_i32, %c0_i32_0 : i32, i32, i32
  }
}

</mosaic_0001>

<llo_original>
// kernel: tpu_custom_call.1
$region0: #{tpu_custom_call.1}
  #allocation0 [shape = 'u32[]', space=smem, size = 0x4, offset = 0x4, fixed_abs, tag = 'smem constant byte address 0x4 - core index']
  #allocation1 [shape = 'u32[144,128]{1,0:T(1,128)}', space=vmem, size = 0x12000, scoped, tag = 'internal scratch']
  %s0 = inlined_call_operand.vmem [shape: f32[2,4,256], index: 0, kind: input, shape index: {}]
  %s1 = inlined_call_operand.vmem [shape: s32[2,256], index: 1, kind: input, shape index: {}]
  %s2 = inlined_call_operand.vmem [shape: f32[9,4,4,1], index: 2, kind: input, shape index: {}]
  %s3 = inlined_call_operand.vmem [shape: f32[4,1], index: 3, kind: input, shape index: {}]
  %s4 = inlined_call_operand.vmem [shape: f32[4,1], index: 4, kind: input, shape index: {}]
  %s5 = inlined_call_operand.vmem [shape: f32[9,4,1], index: 5, kind: input, shape index: {}]
  %s6 = inlined_call_operand.vmem [shape: f32[4,4,1], index: 6, kind: input, shape index: {}]
  %s7 = inlined_call_operand.vmem [shape: f32[4,1], index: 7, kind: input, shape index: {}]
  %s8 = inlined_call_operand.vmem [shape: f32[4,4,1], index: 8, kind: input, shape index: {}]
  %s9 = inlined_call_operand.vmem [shape: f32[4,4,1], index: 9, kind: input, shape index: {}]
  %s10 = inlined_call_operand.hbm [shape: f32[2,4,256], index: 10, kind: output, shape index: {}]
  %s11 = sld [smem:[#allocation0]]
  $region73: #{tpu_custom_call.1} parent=0
    _
  %s13 = ssub.s32 1, %s11
  %s14 = scalar_select 0, %s13, %s11
  $region1: #{tpu_custom_call.1} parent=0
    #allocation2 [shape = 'u8[8192]{0}', space=vmem, size = 0x2000, scoped, tag = 'output window, operand 0']
    #allocation3 [shape = 's32[2]{0}', space=sflag, size = 0x8, scoped, tag = 'scoped memory for tpu_custom_call.1']
    %15 = vsyncpa [#allocation3], 0
    %s16 = scalar_lea.sflag [#allocation3], 1
    %17 = vsyncpa %s16, 0
    loop: start=0, step=1, limit=4
    $region2: #{tpu_custom_call.1} parent=1 // loop_pre_header
      _
    $region3: #{tpu_custom_call.1} parent=1 // loop_header
      %s19 = sphi 0, %s23
      %p20 = scmp.ge.s32.totalorder %s19, 4
      %s29 = sphi 0, %s31
      %s32 = sphi 0, %s29
      %s33 = sphi 0, %s32
      %s49 = sphi 0, %s33
      %s53 = sphi 0, %s53
      %s55 = sphi 0, %s53
      %s56 = sphi 0, %s55
      %s70 = sphi 0, %s56
      %s74 = sphi 0, %s74
      %s76 = sphi 0, %s74
      %s77 = sphi 0, %s76
      %s91 = sphi 0, %s77
      %s95 = sphi 0, %s95
      %s97 = sphi 0, %s95
      %s98 = sphi 0, %s97
      %s112 = sphi 0, %s98
      %s116 = sphi 0, %s116
      %s118 = sphi 0, %s116
      %s119 = sphi 0, %s118
      %s133 = sphi 0, %s119
      %s137 = sphi 0, %s137
      %s139 = sphi 0, %s137
      %s140 = sphi 0, %s139
      %s154 = sphi 0, %s140
      %s158 = sphi 0, %s158
      %s160 = sphi 0, %s158
      %s161 = sphi 0, %s160
      %s175 = sphi 0, %s161
      %s179 = sphi 0, %s179
      %s181 = sphi 0, %s179
      %s182 = sphi 0, %s181
      %s196 = sphi 0, %s182
      %s200 = sphi 0, %s200
      %s202 = sphi 0, %s200
      %s203 = sphi 0, %s202
      %s217 = sphi 0, %s203
      %s221 = sphi 0, %s221
      %s223 = sphi 0, %s221
      %s224 = sphi 0, %s223
      %s238 = sphi 0, %s224
      %s244 = sphi 0, %s246
      %s247 = sphi 0, %s244
      %s248 = sphi 0, %s247
      %s264 = sphi 0, %s248
    $region4: #{tpu_custom_call.1} parent=1 // loop_header_branch
      %22 = sbr.rel (%p20) target = $region8
    $region5: #{tpu_custom_call.1} parent=1 // loop_body
      %s24 = ssub.s32 %s19, 1
      %s25 = ssub.s32 %s19, 2
      %s26 = sadd.s32 %s19, 1
      %s27 = ssub.s32 %s19, %s26
      %p28 = scmp.eq.s32.totalorder %s27, 0
      %s30 = sadd.s32 %s29, 1
      %s31 = scalar_select %p28, %s29, %s30
      %p34 = pneg %p28
      %p35 = scmp.eq.s32.totalorder %s19, 1
      %p36 = por %p34, %p35
      %p37 = scmp.ne.s32.totalorder %s29, %s32
      %p38 = scmp.eq.s32.totalorder %s19, 0
      %p39 = por %p37, %p38
      %p40 = scmp.ne.s32.totalorder %s29, %s32
      %p41 = scmp.eq.s32.totalorder %s24, 1
      %p42 = por %p40, %p41
      %p43 = scmp.ne.s32.totalorder %s32, %s33
      %p44 = scmp.eq.s32.totalorder %s24, 0
      %p45 = por %p43, %p44
      %p46 = scmp.ne.s32.totalorder %s32, %s33
      %p47 = scmp.eq.s32.totalorder %s25, 1
      %p48 = por %p46, %p47
      %p50 = scmp.ne.s32.totalorder %s33, %s49
      %p51 = scmp.eq.s32.totalorder %s25, 0
      %p52 = por %p50, %p51
      %s54 = sadd.s32 %s53, 1
      %p57 = scmp.eq.s32.totalorder %s19, 1
      %p58 = scmp.ne.s32.totalorder %s53, %s55
      %p59 = scmp.eq.s32.totalorder %s19, 0
      %p60 = por %p58, %p59
      %p61 = scmp.ne.s32.totalorder %s53, %s55
      %p62 = scmp.eq.s32.totalorder %s24, 1
      %p63 = por %p61, %p62
      %p64 = scmp.ne.s32.totalorder %s55, %s56
      %p65 = scmp.eq.s32.totalorder %s24, 0
      %p66 = por %p64, %p65
      %p67 = scmp.ne.s32.totalorder %s55, %s56
      %p68 = scmp.eq.s32.totalorder %s25, 1
      %p69 = por %p67, %p68
      %p71 = scmp.ne.s32.totalorder %s56, %s70
      %p72 = scmp.eq.s32.totalorder %s25, 0
      %p73 = por %p71, %p72
      %s75 = sadd.s32 %s74, 1
      %p78 = scmp.eq.s32.totalorder %s19, 1
      %p79 = scmp.ne.s32.totalorder %s74, %s76
      %p80 = scmp.eq.s32.totalorder %s19, 0
      %p81 = por %p79, %p80
      %p82 = scmp.ne.s32.totalorder %s74, %s76
      %p83 = scmp.eq.s32.totalorder %s24, 1
      %p84 = por %p82, %p83
      %p85 = scmp.ne.s32.totalorder %s76, %s77
      %p86 = scmp.eq.s32.totalorder %s24, 0
      %p87 = por %p85, %p86
      %p88 = scmp.ne.s32.totalorder %s76, %s77
      %p89 = scmp.eq.s32.totalorder %s25, 1
      %p90 = por %p88, %p89
      %p92 = scmp.ne.s32.totalorder %s77, %s91
      %p93 = scmp.eq.s32.totalorder %s25, 0
      %p94 = por %p92, %p93
      %s96 = sadd.s32 %s95, 1
      %p99 = scmp.eq.s32.totalorder %s19, 1
      %p100 = scmp.ne.s32.totalorder %s95, %s97
      %p101 = scmp.eq.s32.totalorder %s19, 0
      %p102 = por %p100, %p101
      %p103 = scmp.ne.s32.totalorder %s95, %s97
      %p104 = scmp.eq.s32.totalorder %s24, 1
      %p105 = por %p103, %p104
      %p106 = scmp.ne.s32.totalorder %s97, %s98
      %p107 = scmp.eq.s32.totalorder %s24, 0
      %p108 = por %p106, %p107
      %p109 = scmp.ne.s32.totalorder %s97, %s98
      %p110 = scmp.eq.s32.totalorder %s25, 1
      %p111 = por %p109, %p110
      %p113 = scmp.ne.s32.totalorder %s98, %s112
      %p114 = scmp.eq.s32.totalorder %s25, 0
      %p115 = por %p113, %p114
      %s117 = sadd.s32 %s116, 1
      %p120 = scmp.eq.s32.totalorder %s19, 1
      %p121 = scmp.ne.s32.totalorder %s116, %s118
      %p122 = scmp.eq.s32.totalorder %s19, 0
      %p123 = por %p121, %p122
      %p124 = scmp.ne.s32.totalorder %s116, %s118
      %p125 = scmp.eq.s32.totalorder %s24, 1
      %p126 = por %p124, %p125
      %p127 = scmp.ne.s32.totalorder %s118, %s119
      %p128 = scmp.eq.s32.totalorder %s24, 0
      %p129 = por %p127, %p128
      %p130 = scmp.ne.s32.totalorder %s118, %s119
      %p131 = scmp.eq.s32.totalorder %s25, 1
      %p132 = por %p130, %p131
      %p134 = scmp.ne.s32.totalorder %s119, %s133
      %p135 = scmp.eq.s32.totalorder %s25, 0
      %p136 = por %p134, %p135
      %s138 = sadd.s32 %s137, 1
      %p141 = scmp.eq.s32.totalorder %s19, 1
      %p142 = scmp.ne.s32.totalorder %s137, %s139
      %p143 = scmp.eq.s32.totalorder %s19, 0
      %p144 = por %p142, %p143
      %p145 = scmp.ne.s32.totalorder %s137, %s139
      %p146 = scmp.eq.s32.totalorder %s24, 1
      %p147 = por %p145, %p146
      %p148 = scmp.ne.s32.totalorder %s139, %s140
      %p149 = scmp.eq.s32.totalorder %s24, 0
      %p150 = por %p148, %p149
      %p151 = scmp.ne.s32.totalorder %s139, %s140
      %p152 = scmp.eq.s32.totalorder %s25, 1
      %p153 = por %p151, %p152
      %p155 = scmp.ne.s32.totalorder %s140, %s154
      %p156 = scmp.eq.s32.totalorder %s25, 0
      %p157 = por %p155, %p156
      %s159 = sadd.s32 %s158, 1
      %p162 = scmp.eq.s32.totalorder %s19, 1
      %p163 = scmp.ne.s32.totalorder %s158, %s160
      %p164 = scmp.eq.s32.totalorder %s19, 0
      %p165 = por %p163, %p164
      %p166 = scmp.ne.s32.totalorder %s158, %s160
      %p167 = scmp.eq.s32.totalorder %s24, 1
      %p168 = por %p166, %p167
      %p169 = scmp.ne.s32.totalorder %s160, %s161
      %p170 = scmp.eq.s32.totalorder %s24, 0
      %p171 = por %p169, %p170
      %p172 = scmp.ne.s32.totalorder %s160, %s161
      %p173 = scmp.eq.s32.totalorder %s25, 1
      %p174 = por %p172, %p173
      %p176 = scmp.ne.s32.totalorder %s161, %s175
      %p177 = scmp.eq.s32.totalorder %s25, 0
      %p178 = por %p176, %p177
      %s180 = sadd.s32 %s179, 1
      %p183 = scmp.eq.s32.totalorder %s19, 1
      %p184 = scmp.ne.s32.totalorder %s179, %s181
      %p185 = scmp.eq.s32.totalorder %s19, 0
      %p186 = por %p184, %p185
      %p187 = scmp.ne.s32.totalorder %s179, %s181
      %p188 = scmp.eq.s32.totalorder %s24, 1
      %p189 = por %p187, %p188
      %p190 = scmp.ne.s32.totalorder %s181, %s182
      %p191 = scmp.eq.s32.totalorder %s24, 0
      %p192 = por %p190, %p191
      %p193 = scmp.ne.s32.totalorder %s181, %s182
      %p194 = scmp.eq.s32.totalorder %s25, 1
      %p195 = por %p193, %p194
      %p197 = scmp.ne.s32.totalorder %s182, %s196
      %p198 = scmp.eq.s32.totalorder %s25, 0
      %p199 = por %p197, %p198
      %s201 = sadd.s32 %s200, 1
      %p204 = scmp.eq.s32.totalorder %s19, 1
      %p205 = scmp.ne.s32.totalorder %s200, %s202
      %p206 = scmp.eq.s32.totalorder %s19, 0
      %p207 = por %p205, %p206
      %p208 = scmp.ne.s32.totalorder %s200, %s202
      %p209 = scmp.eq.s32.totalorder %s24, 1
      %p210 = por %p208, %p209
      %p211 = scmp.ne.s32.totalorder %s202, %s203
      %p212 = scmp.eq.s32.totalorder %s24, 0
      %p213 = por %p211, %p212
      %p214 = scmp.ne.s32.totalorder %s202, %s203
      %p215 = scmp.eq.s32.totalorder %s25, 1
      %p216 = por %p214, %p215
      %p218 = scmp.ne.s32.totalorder %s203, %s217
      %p219 = scmp.eq.s32.totalorder %s25, 0
      %p220 = por %p218, %p219
      %s222 = sadd.s32 %s221, 1
      %p225 = scmp.eq.s32.totalorder %s19, 1
      %p226 = scmp.ne.s32.totalorder %s221, %s223
      %p227 = scmp.eq.s32.totalorder %s19, 0
      %p228 = por %p226, %p227
      %p229 = scmp.ne.s32.totalorder %s221, %s223
      %p230 = scmp.eq.s32.totalorder %s24, 1
      %p231 = por %p229, %p230
      %p232 = scmp.ne.s32.totalorder %s223, %s224
      %p233 = scmp.eq.s32.totalorder %s24, 0
      %p234 = por %p232, %p233
      %p235 = scmp.ne.s32.totalorder %s223, %s224
      %p236 = scmp.eq.s32.totalorder %s25, 1
      %p237 = por %p235, %p236
      %p239 = scmp.ne.s32.totalorder %s224, %s238
      %p240 = scmp.eq.s32.totalorder %s25, 0
      %p241 = por %p239, %p240
      %s242 = ssub.s32 %s19, %s26
      %p243 = scmp.eq.s32.totalorder %s242, 0
      %s245 = sadd.s32 %s244, 1
      %s246 = scalar_select %p243, %s244, %s245
      %p249 = pneg %p243
      %p250 = scmp.eq.s32.totalorder %s19, 1
      %p251 = por %p249, %p250
      %p252 = scmp.ne.s32.totalorder %s244, %s247
      %p253 = scmp.eq.s32.totalorder %s19, 0
      %p254 = por %p252, %p253
      %p255 = scmp.ne.s32.totalorder %s244, %s247
      %p256 = scmp.eq.s32.totalorder %s24, 1
      %p257 = por %p255, %p256
      %p258 = scmp.ne.s32.totalorder %s247, %s248
      %p259 = scmp.eq.s32.totalorder %s24, 0
      %p260 = por %p258, %p259
      %p261 = scmp.ne.s32.totalorder %s247, %s248
      %p262 = scmp.eq.s32.totalorder %s25, 1
      %p263 = por %p261, %p262
      %p265 = scmp.ne.s32.totalorder %s248, %s264
      %p266 = scmp.eq.s32.totalorder %s25, 0
      %p267 = por %p265, %p266
      %p268 = scmp.le.s32.totalorder 1, %s19
      %p269 = scmp.lt.s32.totalorder %s19, 3
      %p270 = pnand %p268, %p269
      %p271 = pneg %p270
      // Predicated region
      $region9: #{tpu_custom_call.1} parent=5 // pred_check
        _
      $region10: #{tpu_custom_call.1} parent=5 // pred_check_branch
        %273 = sbr.rel (%p270) target = $region12
      $region11: #{tpu_custom_call.1} parent=5 // pred_region
        %s274 = ssub.s32 %s19, 1
        // Predicated region
        $region13: #{tpu_custom_call.1} parent=11 // pred_check
          %p275 = pneg %p66
        $region14: #{tpu_custom_call.1} parent=11 // pred_check_branch
          %277 = sbr.rel (%p275) target = $region16
        $region15: #{tpu_custom_call.1} parent=11 // pred_region
          _
        $region16: #{tpu_custom_call.1} parent=11 // pred_fallthru
          _
        // Predicated region
        $region17: #{tpu_custom_call.1} parent=11 // pred_check
          %p278 = pneg %p87
        $region18: #{tpu_custom_call.1} parent=11 // pred_check_branch
          %280 = sbr.rel (%p278) target = $region20
        $region19: #{tpu_custom_call.1} parent=11 // pred_region
          _
        $region20: #{tpu_custom_call.1} parent=11 // pred_fallthru
          _
        // Predicated region
        $region21: #{tpu_custom_call.1} parent=11 // pred_check
          %p281 = pneg %p108
        $region22: #{tpu_custom_call.1} parent=11 // pred_check_branch
          %283 = sbr.rel (%p281) target = $region24
        $region23: #{tpu_custom_call.1} parent=11 // pred_region
          _
        $region24: #{tpu_custom_call.1} parent=11 // pred_fallthru
          _
        // Predicated region
        $region25: #{tpu_custom_call.1} parent=11 // pred_check
          %p284 = pneg %p129
        $region26: #{tpu_custom_call.1} parent=11 // pred_check_branch
          %286 = sbr.rel (%p284) target = $region28
        $region27: #{tpu_custom_call.1} parent=11 // pred_region
          _
        $region28: #{tpu_custom_call.1} parent=11 // pred_fallthru
          _
        // Predicated region
        $region29: #{tpu_custom_call.1} parent=11 // pred_check
          %p287 = pneg %p150
        $region30: #{tpu_custom_call.1} parent=11 // pred_check_branch
          %289 = sbr.rel (%p287) target = $region32
        $region31: #{tpu_custom_call.1} parent=11 // pred_region
          _
        $region32: #{tpu_custom_call.1} parent=11 // pred_fallthru
          _
        // Predicated region
        $region33: #{tpu_custom_call.1} parent=11 // pred_check
          %p290 = pneg %p171
        $region34: #{tpu_custom_call.1} parent=11 // pred_check_branch
          %292 = sbr.rel (%p290) target = $region36
        $region35: #{tpu_custom_call.1} parent=11 // pred_region
          _
        $region36: #{tpu_custom_call.1} parent=11 // pred_fallthru
          _
        // Predicated region
        $region37: #{tpu_custom_call.1} parent=11 // pred_check
          %p293 = pneg %p192
        $region38: #{tpu_custom_call.1} parent=11 // pred_check_branch
          %295 = sbr.rel (%p293) target = $region40
        $region39: #{tpu_custom_call.1} parent=11 // pred_region
          _
        $region40: #{tpu_custom_call.1} parent=11 // pred_fallthru
          _
        // Predicated region
        $region41: #{tpu_custom_call.1} parent=11 // pred_check
          %p296 = pneg %p213
        $region42: #{tpu_custom_call.1} parent=11 // pred_check_branch
          %298 = sbr.rel (%p296) target = $region44
        $region43: #{tpu_custom_call.1} parent=11 // pred_region
          _
        $region44: #{tpu_custom_call.1} parent=11 // pred_fallthru
          _
        // Predicated region
        $region45: #{tpu_custom_call.1} parent=11 // pred_check
          %p299 = pneg %p234
        $region46: #{tpu_custom_call.1} parent=11 // pred_check_branch
          %301 = sbr.rel (%p299) target = $region48
        $region47: #{tpu_custom_call.1} parent=11 // pred_region
          _
        $region48: #{tpu_custom_call.1} parent=11 // pred_fallthru
          _
      $region12: #{tpu_custom_call.1} parent=5 // pred_fallthru
        _
      %p302 = scmp.lt.s32.totalorder %s19, 2
      // Predicated region
      $region49: #{tpu_custom_call.1} parent=5 // pred_check
        %p303 = pneg %p302
      $region50: #{tpu_custom_call.1} parent=5 // pred_check_branch
        %305 = sbr.rel (%p303) target = $region52
      $region51: #{tpu_custom_call.1} parent=5 // pred_region
        // Predicated region
        $region53: #{tpu_custom_call.1} parent=51 // pred_check
          %p306 = pneg %p39
        $region54: #{tpu_custom_call.1} parent=51 // pred_check_branch
          %308 = sbr.rel (%p306) target = $region56
        $region55: #{tpu_custom_call.1} parent=51 // pred_region
          %p309 = scmp.lt.s32.totalorder %s19, 1
          %s310 = scalar_select %p309, %s19, 1
          %s311 = smul.addr %s310, 2
          %s312 = smul.addr %s311, 4
          %s313 = scalar_lea.vmem %s0, %s312
        $region56: #{tpu_custom_call.1} parent=51 // pred_fallthru
          _
      $region52: #{tpu_custom_call.1} parent=5 // pred_fallthru
        _
      %p314 = scmp.le.s32.totalorder 1, %s19
      %p315 = scmp.lt.s32.totalorder %s19, 3
      %p316 = pnand %p314, %p315
      %p317 = pneg %p316
      // Predicated region
      $region57: #{tpu_custom_call.1} parent=5 // pred_check
        _
      $region58: #{tpu_custom_call.1} parent=5 // pred_check_branch
        %319 = sbr.rel (%p316) target = $region60
      $region59: #{tpu_custom_call.1} parent=5 // pred_region
        %s320 = ssub.s32 %s19, 1
        %p321 = scmp.lt.s32.totalorder %s24, 1
        %s322 = scalar_select %p321, %s24, 1
        %s323 = smul.addr %s322, 2
        %s324 = smul.addr %s323, 4
        %s325 = scalar_lea.vmem %s0, %s324
        %p326 = pneg %p45
        %p327 = pneg %p42
        %p328 = pneg %p66
        %p329 = pneg %p63
        %p330 = pneg %p87
        %p331 = pneg %p84
        %p332 = pneg %p108
        %p333 = pneg %p105
        %p334 = pneg %p129
        %p335 = pneg %p126
        %p336 = pneg %p150
        %p337 = pneg %p147
        %p338 = pneg %p171
        %p339 = pneg %p168
        %p340 = pneg %p192
        %p341 = pneg %p189
        %p342 = pneg %p213
        %p343 = pneg %p210
        %p344 = pneg %p234
        %p345 = pneg %p231
        %p346 = pneg %p260
        %p347 = pneg %p257
        %s348 = sand.u32 %s247, 1
        %s349 = scalar_lea.sflag [#allocation3], %s348
        %s350 = sand.u32 %s247, 1
        %s351 = smul.addr %s350, 8
        %s352 = scalar_lea.vmem [#allocation2], %s351
        %p353 = scmp.lt.s32.totalorder %s24, 1
        %s354 = scalar_select %p353, %s24, 1
        %s355 = smul.addr %s354, 2
        %s356 = smul.addr %s355, 4
        %s357 = scalar_lea.vmem %s0, %s356
        %v358 = vld [vmem:[%s357] sm:$0xff]
        %v359 = vld [vmem:[%s1] sm:$0xf]
        %v360 = vld [vmem:[%s2] sm:$0xf]
        %v361 = vld [vmem:[%s2 + $0x4] sm:$0xf]
        %v362 = vld [vmem:[%s2 + $0x8] sm:$0xf]
        %v363 = vld [vmem:[%s2 + $0xc] sm:$0xf]
        %v364 = vld [vmem:[%s2 + $0x10] sm:$0xf]
        %v365 = vld [vmem:[%s2 + $0x14] sm:$0xf]
        %v366 = vld [vmem:[%s2 + $0x18] sm:$0xf]
        %v367 = vld [vmem:[%s2 + $0x1c] sm:$0xf]
        %v368 = vld [vmem:[%s2 + $0x20] sm:$0xf]
        %v369 = vld [vmem:[%s2 + $0x24] sm:$0xf]
        %v370 = vld [vmem:[%s2 + $0x28] sm:$0xf]
        %v371 = vld [vmem:[%s2 + $0x2c] sm:$0xf]
        %v372 = vld [vmem:[%s2 + $0x30] sm:$0xf]
        %v373 = vld [vmem:[%s2 + $0x34] sm:$0xf]
        %v374 = vld [vmem:[%s2 + $0x38] sm:$0xf]
        %v375 = vld [vmem:[%s2 + $0x3c] sm:$0xf]
        %v376 = vld [vmem:[%s2 + $0x40] sm:$0xf]
        %v377 = vld [vmem:[%s2 + $0x44] sm:$0xf]
        %v378 = vld [vmem:[%s2 + $0x48] sm:$0xf]
        %v379 = vld [vmem:[%s2 + $0x4c] sm:$0xf]
        %v380 = vld [vmem:[%s2 + $0x50] sm:$0xf]
        %v381 = vld [vmem:[%s2 + $0x54] sm:$0xf]
        %v382 = vld [vmem:[%s2 + $0x58] sm:$0xf]
        %v383 = vld [vmem:[%s2 + $0x5c] sm:$0xf]
        %v384 = vld [vmem:[%s2 + $0x60] sm:$0xf]
        %v385 = vld [vmem:[%s2 + $0x64] sm:$0xf]
        %v386 = vld [vmem:[%s2 + $0x68] sm:$0xf]
        %v387 = vld [vmem:[%s2 + $0x6c] sm:$0xf]
        %v388 = vld [vmem:[%s2 + $0x70] sm:$0xf]
        %v389 = vld [vmem:[%s2 + $0x74] sm:$0xf]
        %v390 = vld [vmem:[%s2 + $0x78] sm:$0xf]
        %v391 = vld [vmem:[%s2 + $0x7c] sm:$0xf]
        %v392 = vld [vmem:[%s2 + $0x80] sm:$0xf]
        %v393 = vld [vmem:[%s2 + $0x84] sm:$0xf]
        %v394 = vld [vmem:[%s2 + $0x88] sm:$0xf]
        %v395 = vld [vmem:[%s2 + $0x8c] sm:$0xf]
        %v396 = vld [vmem:[%s5] sm:$0xf]
        %v397 = vld [vmem:[%s5 + $0x4] sm:$0xf]
        %v398 = vld [vmem:[%s5 + $0x8] sm:$0xf]
        %v399 = vld [vmem:[%s5 + $0xc] sm:$0xf]
        %v400 = vld [vmem:[%s5 + $0x10] sm:$0xf]
        %v401 = vld [vmem:[%s5 + $0x14] sm:$0xf]
        %v402 = vld [vmem:[%s5 + $0x18] sm:$0xf]
        %v403 = vld [vmem:[%s5 + $0x1c] sm:$0xf]
        %v404 = vld [vmem:[%s5 + $0x20] sm:$0xf]
        %v405 = vld [vmem:[%s6] sm:$0xf]
        %v406 = vld [vmem:[%s6 + $0x4] sm:$0xf]
        %v407 = vld [vmem:[%s6 + $0x8] sm:$0xf]
        %v408 = vld [vmem:[%s6 + $0xc] sm:$0xf]
        %v409 = vld [vmem:[%s8] sm:$0xf]
        %v410 = vld [vmem:[%s8 + $0x4] sm:$0xf]
        %v411 = vld [vmem:[%s8 + $0x8] sm:$0xf]
        %v412 = vld [vmem:[%s8 + $0xc] sm:$0xf]
        %v413 = vld [vmem:[%s9] sm:$0xf]
        %v414 = vld [vmem:[%s9 + $0x4] sm:$0xf]
        %v415 = vld [vmem:[%s9 + $0x8] sm:$0xf]
        %v416 = vld [vmem:[%s9 + $0xc] sm:$0xf]
        %v418 = vcombine.high %v358, %v358
        %420 = vrot.lane.b32.xlu0 %v358, 17
        %v421 = vpop.permute.xlu0 %420
        %422 = vrot.lane.b32.xlu0 %v418, 17
        %v423 = vpop.permute.xlu0 %422
        %v424 = vlaneseq
        %v425 = vand.u32 %v424, 127
        %vm426 = vcmp.lt.s32.totalorder %v425, 17
        %v427 = vsel %vm426, %v421, %v423
        %v428 = vsel %vm426, %v423, %v421
        %vm429 = vcmp.ge.s32.totalorder %v359, 1
        %v430 = vsel %vm429, 1, 0
        %v431 = vrot.slane %v430, 7
        %v432 = vrot.slane %v431, 2
        %vm433 = vcmp.ne.s32.totalorder %v432, 0
        %vm434 = vmand %vm429, %vm433
        %v435 = vsel %vm434, 1, 0
        %v436 = vlaneseq
        %v437 = vshrl.u32 %v436, 7
        %v438 = vsub.s32 0, %v437
        %v439 = vrot.slane %v435, %v438
        %v440 = vlaneseq
        %v441 = vshrl.u32 %v440, 7
        %v442 = vsub.s32 2, %v441
        %v443 = vrot.slane %v435, %v442
        %v444 = vlaneseq
        %v445 = vshrl.u32 %v444, 7
        %v446 = vsub.s32 0, %v445
        %v447 = vrot.slane %v439, %v446
        %v448 = vlaneseq
        %v449 = vshrl.u32 %v448, 7
        %v450 = vsub.s32 0, %v449
        %v451 = vrot.slane %v443, %v450
        %vm452 = vcmp.eq.s32.totalorder %v447, 1
        %vm453 = vcmp.eq.s32.totalorder %v451, 1
        %v454 = vsel %vm452, %v428, 0.0
        %v455 = vsel %vm453, %v427, 0.0
        %457 = vset.pattern.permute.xlu0 0
        %458 = vperm.xlu0 %457, %v360
        %v459 = vpop.permute.xlu0 %458
        %v461 = vlaneseq
        %v462 = vshrl.u32 %v461, 7
        %v463 = vsub.s32 0, %v462
        %v464 = vrot.slane %v454, %v463
        %v465 = vlaneseq
        %v466 = vshrl.u32 %v465, 7
        %v467 = vsub.s32 0, %v466
        %v468 = vrot.slane %v455, %v467
        %v469 = vmul.f32 %v459, %v464
        %v470 = vmul.f32 %v459, %v468
        %v471 = vadd.f32 %v469, 0.0
        %v472 = vadd.f32 %v470, 0.0
        %474 = vset.pattern.permute.xlu0 0
        %475 = vperm.xlu0 %474, %v361
        %v476 = vpop.permute.xlu0 %475
        %v478 = vlaneseq
        %v479 = vshrl.u32 %v478, 7
        %v480 = vsub.s32 1, %v479
        %v481 = vrot.slane %v454, %v480
        %v482 = vlaneseq
        %v483 = vshrl.u32 %v482, 7
        %v484 = vsub.s32 1, %v483
        %v485 = vrot.slane %v455, %v484
        %v486 = vmul.f32 %v476, %v481
        %v487 = vmul.f32 %v476, %v485
        %v488 = vadd.f32 %v471, %v486
        %v489 = vadd.f32 %v472, %v487
        %491 = vset.pattern.permute.xlu0 0
        %492 = vperm.xlu0 %491, %v362
        %v493 = vpop.permute.xlu0 %492
        %v495 = vlaneseq
        %v496 = vshrl.u32 %v495, 7
        %v497 = vsub.s32 2, %v496
        %v498 = vrot.slane %v454, %v497
        %v499 = vlaneseq
        %v500 = vshrl.u32 %v499, 7
        %v501 = vsub.s32 2, %v500
        %v502 = vrot.slane %v455, %v501
        %v503 = vmul.f32 %v493, %v498
        %v504 = vmul.f32 %v493, %v502
        %v505 = vadd.f32 %v488, %v503
        %v506 = vadd.f32 %v489, %v504
        %508 = vset.pattern.permute.xlu0 0
        %509 = vperm.xlu0 %508, %v363
        %v510 = vpop.permute.xlu0 %509
        %v512 = vlaneseq
        %v513 = vshrl.u32 %v512, 7
        %v514 = vsub.s32 3, %v513
        %v515 = vrot.slane %v454, %v514
        %v516 = vlaneseq
        %v517 = vshrl.u32 %v516, 7
        %v518 = vsub.s32 3, %v517
        %v519 = vrot.slane %v455, %v518
        %v520 = vmul.f32 %v510, %v515
        %v521 = vmul.f32 %v510, %v519
        %v522 = vadd.f32 %v505, %v520
        %v523 = vadd.f32 %v506, %v521
        %524 = vrot.lane.b32.xlu0 %v358, 16
        %v525 = vpop.permute.xlu0 %524
        %526 = vrot.lane.b32.xlu0 %v418, 16
        %v527 = vpop.permute.xlu0 %526
        %vm528 = vcmp.lt.s32.totalorder %v425, 16
        %v529 = vsel %vm528, %v525, %v527
        %v530 = vsel %vm528, %v527, %v525
        %v531 = vlaneseq
        %v532 = vshrl.u32 %v531, 7
        %v533 = vsub.s32 0, %v532
        %v534 = vrot.slane %v430, %v533
        %v535 = vlaneseq
        %v536 = vshrl.u32 %v535, 7
        %v537 = vsub.s32 2, %v536
        %v538 = vrot.slane %v430, %v537
        %v539 = vlaneseq
        %v540 = vshrl.u32 %v539, 7
        %v541 = vsub.s32 0, %v540
        %v542 = vrot.slane %v534, %v541
        %v543 = vlaneseq
        %v544 = vshrl.u32 %v543, 7
        %v545 = vsub.s32 0, %v544
        %v546 = vrot.slane %v538, %v545
        %vm547 = vcmp.eq.s32.totalorder %v542, 1
        %vm548 = vcmp.eq.s32.totalorder %v546, 1
        %v549 = vsel %vm547, %v530, 0.0
        %v550 = vsel %vm548, %v529, 0.0
        %552 = vset.pattern.permute.xlu0 0
        %553 = vperm.xlu0 %552, %v364
        %v554 = vpop.permute.xlu0 %553
        %v556 = vlaneseq
        %v557 = vshrl.u32 %v556, 7
        %v558 = vsub.s32 0, %v557
        %v559 = vrot.slane %v549, %v558
        %v560 = vlaneseq
        %v561 = vshrl.u32 %v560, 7
        %v562 = vsub.s32 0, %v561
        %v563 = vrot.slane %v550, %v562
        %v564 = vmul.f32 %v554, %v559
        %v565 = vmul.f32 %v554, %v563
        %v566 = vadd.f32 %v522, %v564
        %v567 = vadd.f32 %v523, %v565
        %569 = vset.pattern.permute.xlu0 0
        %570 = vperm.xlu0 %569, %v365
        %v571 = vpop.permute.xlu0 %570
        %v573 = vlaneseq
        %v574 = vshrl.u32 %v573, 7
        %v575 = vsub.s32 1, %v574
        %v576 = vrot.slane %v549, %v575
        %v577 = vlaneseq
        %v578 = vshrl.u32 %v577, 7
        %v579 = vsub.s32 1, %v578
        %v580 = vrot.slane %v550, %v579
        %v581 = vmul.f32 %v571, %v576
        %v582 = vmul.f32 %v571, %v580
        %v583 = vadd.f32 %v566, %v581
        %v584 = vadd.f32 %v567, %v582
        %586 = vset.pattern.permute.xlu0 0
        %587 = vperm.xlu0 %586, %v366
        %v588 = vpop.permute.xlu0 %587
        %v590 = vlaneseq
        %v591 = vshrl.u32 %v590, 7
        %v592 = vsub.s32 2, %v591
        %v593 = vrot.slane %v549, %v592
        %v594 = vlaneseq
        %v595 = vshrl.u32 %v594, 7
        %v596 = vsub.s32 2, %v595
        %v597 = vrot.slane %v550, %v596
        %v598 = vmul.f32 %v588, %v593
        %v599 = vmul.f32 %v588, %v597
        %v600 = vadd.f32 %v583, %v598
        %v601 = vadd.f32 %v584, %v599
        %603 = vset.pattern.permute.xlu0 0
        %604 = vperm.xlu0 %603, %v367
        %v605 = vpop.permute.xlu0 %604
        %v607 = vlaneseq
        %v608 = vshrl.u32 %v607, 7
        %v609 = vsub.s32 3, %v608
        %v610 = vrot.slane %v549, %v609
        %v611 = vlaneseq
        %v612 = vshrl.u32 %v611, 7
        %v613 = vsub.s32 3, %v612
        %v614 = vrot.slane %v550, %v613
        %v615 = vmul.f32 %v605, %v610
        %v616 = vmul.f32 %v605, %v614
        %v617 = vadd.f32 %v600, %v615
        %v618 = vadd.f32 %v601, %v616
        %619 = vrot.lane.b32.xlu0 %v358, 15
        %v620 = vpop.permute.xlu0 %619
        %621 = vrot.lane.b32.xlu0 %v418, 15
        %v622 = vpop.permute.xlu0 %621
        %vm623 = vcmp.lt.s32.totalorder %v425, 15
        %v624 = vsel %vm623, %v620, %v622
        %v625 = vsel %vm623, %v622, %v620
        %vm626 = vcmp.lt.s32.totalorder %v359, 15
        %v627 = vsel %vm626, 1, 0
        %v628 = vrot.slane %v627, 7
        %v629 = vrot.slane %v628, 2
        %vm630 = vcmp.ne.s32.totalorder %v629, 0
        %vm631 = vmand %vm429, %vm630
        %v632 = vsel %vm631, 1, 0
        %v633 = vlaneseq
        %v634 = vshrl.u32 %v633, 7
        %v635 = vsub.s32 0, %v634
        %v636 = vrot.slane %v632, %v635
        %v637 = vlaneseq
        %v638 = vshrl.u32 %v637, 7
        %v639 = vsub.s32 2, %v638
        %v640 = vrot.slane %v632, %v639
        %v641 = vlaneseq
        %v642 = vshrl.u32 %v641, 7
        %v643 = vsub.s32 0, %v642
        %v644 = vrot.slane %v636, %v643
        %v645 = vlaneseq
        %v646 = vshrl.u32 %v645, 7
        %v647 = vsub.s32 0, %v646
        %v648 = vrot.slane %v640, %v647
        %vm649 = vcmp.eq.s32.totalorder %v644, 1
        %vm650 = vcmp.eq.s32.totalorder %v648, 1
        %v651 = vsel %vm649, %v625, 0.0
        %v652 = vsel %vm650, %v624, 0.0
        %654 = vset.pattern.permute.xlu0 0
        %655 = vperm.xlu0 %654, %v368
        %v656 = vpop.permute.xlu0 %655
        %v658 = vlaneseq
        %v659 = vshrl.u32 %v658, 7
        %v660 = vsub.s32 0, %v659
        %v661 = vrot.slane %v651, %v660
        %v662 = vlaneseq
        %v663 = vshrl.u32 %v662, 7
        %v664 = vsub.s32 0, %v663
        %v665 = vrot.slane %v652, %v664
        %v666 = vmul.f32 %v656, %v661
        %v667 = vmul.f32 %v656, %v665
        %v668 = vadd.f32 %v617, %v666
        %v669 = vadd.f32 %v618, %v667
        %671 = vset.pattern.permute.xlu0 0
        %672 = vperm.xlu0 %671, %v369
        %v673 = vpop.permute.xlu0 %672
        %v675 = vlaneseq
        %v676 = vshrl.u32 %v675, 7
        %v677 = vsub.s32 1, %v676
        %v678 = vrot.slane %v651, %v677
        %v679 = vlaneseq
        %v680 = vshrl.u32 %v679, 7
        %v681 = vsub.s32 1, %v680
        %v682 = vrot.slane %v652, %v681
        %v683 = vmul.f32 %v673, %v678
        %v684 = vmul.f32 %v673, %v682
        %v685 = vadd.f32 %v668, %v683
        %v686 = vadd.f32 %v669, %v684
        %688 = vset.pattern.permute.xlu0 0
        %689 = vperm.xlu0 %688, %v370
        %v690 = vpop.permute.xlu0 %689
        %v692 = vlaneseq
        %v693 = vshrl.u32 %v692, 7
        %v694 = vsub.s32 2, %v693
        %v695 = vrot.slane %v651, %v694
        %v696 = vlaneseq
        %v697 = vshrl.u32 %v696, 7
        %v698 = vsub.s32 2, %v697
        %v699 = vrot.slane %v652, %v698
        %v700 = vmul.f32 %v690, %v695
        %v701 = vmul.f32 %v690, %v699
        %v702 = vadd.f32 %v685, %v700
        %v703 = vadd.f32 %v686, %v701
        %705 = vset.pattern.permute.xlu0 0
        %706 = vperm.xlu0 %705, %v371
        %v707 = vpop.permute.xlu0 %706
        %v709 = vlaneseq
        %v710 = vshrl.u32 %v709, 7
        %v711 = vsub.s32 3, %v710
        %v712 = vrot.slane %v651, %v711
        %v713 = vlaneseq
        %v714 = vshrl.u32 %v713, 7
        %v715 = vsub.s32 3, %v714
        %v716 = vrot.slane %v652, %v715
        %v717 = vmul.f32 %v707, %v712
        %v718 = vmul.f32 %v707, %v716
        %v719 = vadd.f32 %v702, %v717
        %v720 = vadd.f32 %v703, %v718
        %721 = vrot.lane.b32.xlu0 %v358, 1
        %v722 = vpop.permute.xlu0 %721
        %723 = vrot.lane.b32.xlu0 %v418, 1
        %v724 = vpop.permute.xlu0 %723
        %vm725 = vcmp.lt.s32.totalorder %v425, 1
        %v726 = vsel %vm725, %v722, %v724
        %v727 = vsel %vm725, %v724, %v722
        %v728 = vlaneseq
        %v729 = vshrl.u32 %v728, 7
        %v730 = vsub.s32 1, %v729
        %v731 = vrot.slane %v430, %v730
        %v732 = vlaneseq
        %v733 = vshrl.u32 %v732, 7
        %v734 = vsub.s32 3, %v733
        %v735 = vrot.slane %v430, %v734
        %v736 = vlaneseq
        %v737 = vshrl.u32 %v736, 7
        %v738 = vsub.s32 1, %v737
        %v739 = vrot.slane %v731, %v738
        %v740 = vlaneseq
        %v741 = vshrl.u32 %v740, 7
        %v742 = vsub.s32 1, %v741
        %v743 = vrot.slane %v735, %v742
        %vm744 = vcmp.eq.s32.totalorder %v739, 1
        %vm745 = vcmp.eq.s32.totalorder %v743, 1
        %v746 = vsel %vm744, %v727, 0.0
        %v747 = vsel %vm745, %v726, 0.0
        %749 = vset.pattern.permute.xlu0 0
        %750 = vperm.xlu0 %749, %v372
        %v751 = vpop.permute.xlu0 %750
        %v753 = vlaneseq
        %v754 = vshrl.u32 %v753, 7
        %v755 = vsub.s32 0, %v754
        %v756 = vrot.slane %v746, %v755
        %v757 = vlaneseq
        %v758 = vshrl.u32 %v757, 7
        %v759 = vsub.s32 0, %v758
        %v760 = vrot.slane %v747, %v759
        %v761 = vmul.f32 %v751, %v756
        %v762 = vmul.f32 %v751, %v760
        %v763 = vadd.f32 %v719, %v761
        %v764 = vadd.f32 %v720, %v762
        %766 = vset.pattern.permute.xlu0 0
        %767 = vperm.xlu0 %766, %v373
        %v768 = vpop.permute.xlu0 %767
        %v770 = vlaneseq
        %v771 = vshrl.u32 %v770, 7
        %v772 = vsub.s32 1, %v771
        %v773 = vrot.slane %v746, %v772
        %v774 = vlaneseq
        %v775 = vshrl.u32 %v774, 7
        %v776 = vsub.s32 1, %v775
        %v777 = vrot.slane %v747, %v776
        %v778 = vmul.f32 %v768, %v773
        %v779 = vmul.f32 %v768, %v777
        %v780 = vadd.f32 %v763, %v778
        %v781 = vadd.f32 %v764, %v779
        %783 = vset.pattern.permute.xlu0 0
        %784 = vperm.xlu0 %783, %v374
        %v785 = vpop.permute.xlu0 %784
        %v787 = vlaneseq
        %v788 = vshrl.u32 %v787, 7
        %v789 = vsub.s32 2, %v788
        %v790 = vrot.slane %v746, %v789
        %v791 = vlaneseq
        %v792 = vshrl.u32 %v791, 7
        %v793 = vsub.s32 2, %v792
        %v794 = vrot.slane %v747, %v793
        %v795 = vmul.f32 %v785, %v790
        %v796 = vmul.f32 %v785, %v794
        %v797 = vadd.f32 %v780, %v795
        %v798 = vadd.f32 %v781, %v796
        %800 = vset.pattern.permute.xlu0 0
        %801 = vperm.xlu0 %800, %v375
        %v802 = vpop.permute.xlu0 %801
        %v804 = vlaneseq
        %v805 = vshrl.u32 %v804, 7
        %v806 = vsub.s32 3, %v805
        %v807 = vrot.slane %v746, %v806
        %v808 = vlaneseq
        %v809 = vshrl.u32 %v808, 7
        %v810 = vsub.s32 3, %v809
        %v811 = vrot.slane %v747, %v810
        %v812 = vmul.f32 %v802, %v807
        %v813 = vmul.f32 %v802, %v811
        %v814 = vadd.f32 %v797, %v812
        %v815 = vadd.f32 %v798, %v813
        %817 = vset.pattern.permute.xlu0 0
        %818 = vperm.xlu0 %817, %v376
        %v819 = vpop.permute.xlu0 %818
        %v821 = vlaneseq
        %v822 = vshrl.u32 %v821, 7
        %v823 = vsub.s32 0, %v822
        %v824 = vrot.slane %v358, %v823
        %v825 = vlaneseq
        %v826 = vshrl.u32 %v825, 7
        %v827 = vsub.s32 4, %v826
        %v828 = vrot.slane %v358, %v827
        %v831 = vlaneseq
        %v832 = vshrl.u32 %v831, 7
        %v833 = vsub.s32 0, %v832
        %v834 = vrot.slane %v824, %v833
        %v835 = vlaneseq
        %v836 = vshrl.u32 %v835, 7
        %v837 = vsub.s32 0, %v836
        %v838 = vrot.slane %v828, %v837
        %v839 = vmul.f32 %v819, %v834
        %v840 = vmul.f32 %v819, %v838
        %v841 = vadd.f32 %v814, %v839
        %v842 = vadd.f32 %v815, %v840
        %844 = vset.pattern.permute.xlu0 0
        %845 = vperm.xlu0 %844, %v377
        %v846 = vpop.permute.xlu0 %845
        %v848 = vlaneseq
        %v849 = vshrl.u32 %v848, 7
        %v850 = vsub.s32 1, %v849
        %v851 = vrot.slane %v358, %v850
        %v852 = vlaneseq
        %v853 = vshrl.u32 %v852, 7
        %v854 = vsub.s32 5, %v853
        %v855 = vrot.slane %v358, %v854
        %v858 = vlaneseq
        %v859 = vshrl.u32 %v858, 7
        %v860 = vsub.s32 1, %v859
        %v861 = vrot.slane %v851, %v860
        %v862 = vlaneseq
        %v863 = vshrl.u32 %v862, 7
        %v864 = vsub.s32 1, %v863
        %v865 = vrot.slane %v855, %v864
        %v866 = vmul.f32 %v846, %v861
        %v867 = vmul.f32 %v846, %v865
        %v868 = vadd.f32 %v841, %v866
        %v869 = vadd.f32 %v842, %v867
        %871 = vset.pattern.permute.xlu0 0
        %872 = vperm.xlu0 %871, %v378
        %v873 = vpop.permute.xlu0 %872
        %v875 = vlaneseq
        %v876 = vshrl.u32 %v875, 7
        %v877 = vsub.s32 2, %v876
        %v878 = vrot.slane %v358, %v877
        %v879 = vlaneseq
        %v880 = vshrl.u32 %v879, 7
        %v881 = vsub.s32 6, %v880
        %v882 = vrot.slane %v358, %v881
        %v885 = vlaneseq
        %v886 = vshrl.u32 %v885, 7
        %v887 = vsub.s32 2, %v886
        %v888 = vrot.slane %v878, %v887
        %v889 = vlaneseq
        %v890 = vshrl.u32 %v889, 7
        %v891 = vsub.s32 2, %v890
        %v892 = vrot.slane %v882, %v891
        %v893 = vmul.f32 %v873, %v888
        %v894 = vmul.f32 %v873, %v892
        %v895 = vadd.f32 %v868, %v893
        %v896 = vadd.f32 %v869, %v894
        %898 = vset.pattern.permute.xlu0 0
        %899 = vperm.xlu0 %898, %v379
        %v900 = vpop.permute.xlu0 %899
        %v902 = vlaneseq
        %v903 = vshrl.u32 %v902, 7
        %v904 = vsub.s32 3, %v903
        %v905 = vrot.slane %v358, %v904
        %v906 = vlaneseq
        %v907 = vshrl.u32 %v906, 7
        %v908 = vsub.s32 7, %v907
        %v909 = vrot.slane %v358, %v908
        %v912 = vlaneseq
        %v913 = vshrl.u32 %v912, 7
        %v914 = vsub.s32 3, %v913
        %v915 = vrot.slane %v905, %v914
        %v916 = vlaneseq
        %v917 = vshrl.u32 %v916, 7
        %v918 = vsub.s32 3, %v917
        %v919 = vrot.slane %v909, %v918
        %v920 = vmul.f32 %v900, %v915
        %v921 = vmul.f32 %v900, %v919
        %v922 = vadd.f32 %v895, %v920
        %v923 = vadd.f32 %v896, %v921
        %924 = vrot.lane.b32.xlu0 %v358, 127
        %v925 = vpop.permute.xlu0 %924
        %926 = vrot.lane.b32.xlu0 %v418, 127
        %v927 = vpop.permute.xlu0 %926
        %vm928 = vcmp.lt.s32.totalorder %v425, 127
        %v929 = vsel %vm928, %v925, %v927
        %v930 = vsel %vm928, %v927, %v925
        %v931 = vlaneseq
        %v932 = vshrl.u32 %v931, 7
        %v933 = vsub.s32 1, %v932
        %v934 = vrot.slane %v627, %v933
        %v935 = vlaneseq
        %v936 = vshrl.u32 %v935, 7
        %v937 = vsub.s32 3, %v936
        %v938 = vrot.slane %v627, %v937
        %v939 = vlaneseq
        %v940 = vshrl.u32 %v939, 7
        %v941 = vsub.s32 1, %v940
        %v942 = vrot.slane %v934, %v941
        %v943 = vlaneseq
        %v944 = vshrl.u32 %v943, 7
        %v945 = vsub.s32 1, %v944
        %v946 = vrot.slane %v938, %v945
        %vm947 = vcmp.eq.s32.totalorder %v942, 1
        %vm948 = vcmp.eq.s32.totalorder %v946, 1
        %v949 = vsel %vm947, %v929, 0.0
        %v950 = vsel %vm948, %v930, 0.0
        %952 = vset.pattern.permute.xlu0 0
        %953 = vperm.xlu0 %952, %v380
        %v954 = vpop.permute.xlu0 %953
        %v956 = vlaneseq
        %v957 = vshrl.u32 %v956, 7
        %v958 = vsub.s32 0, %v957
        %v959 = vrot.slane %v949, %v958
        %v960 = vlaneseq
        %v961 = vshrl.u32 %v960, 7
        %v962 = vsub.s32 0, %v961
        %v963 = vrot.slane %v950, %v962
        %v964 = vmul.f32 %v954, %v959
        %v965 = vmul.f32 %v954, %v963
        %v966 = vadd.f32 %v922, %v964
        %v967 = vadd.f32 %v923, %v965
        %969 = vset.pattern.permute.xlu0 0
        %970 = vperm.xlu0 %969, %v381
        %v971 = vpop.permute.xlu0 %970
        %v973 = vlaneseq
        %v974 = vshrl.u32 %v973, 7
        %v975 = vsub.s32 1, %v974
        %v976 = vrot.slane %v949, %v975
        %v977 = vlaneseq
        %v978 = vshrl.u32 %v977, 7
        %v979 = vsub.s32 1, %v978
        %v980 = vrot.slane %v950, %v979
        %v981 = vmul.f32 %v971, %v976
        %v982 = vmul.f32 %v971, %v980
        %v983 = vadd.f32 %v966, %v981
        %v984 = vadd.f32 %v967, %v982
        %986 = vset.pattern.permute.xlu0 0
        %987 = vperm.xlu0 %986, %v382
        %v988 = vpop.permute.xlu0 %987
        %v990 = vlaneseq
        %v991 = vshrl.u32 %v990, 7
        %v992 = vsub.s32 2, %v991
        %v993 = vrot.slane %v949, %v992
        %v994 = vlaneseq
        %v995 = vshrl.u32 %v994, 7
        %v996 = vsub.s32 2, %v995
        %v997 = vrot.slane %v950, %v996
        %v998 = vmul.f32 %v988, %v993
        %v999 = vmul.f32 %v988, %v997
        %v1000 = vadd.f32 %v983, %v998
        %v1001 = vadd.f32 %v984, %v999
        %1003 = vset.pattern.permute.xlu0 0
        %1004 = vperm.xlu0 %1003, %v383
        %v1005 = vpop.permute.xlu0 %1004
        %v1007 = vlaneseq
        %v1008 = vshrl.u32 %v1007, 7
        %v1009 = vsub.s32 3, %v1008
        %v1010 = vrot.slane %v949, %v1009
        %v1011 = vlaneseq
        %v1012 = vshrl.u32 %v1011, 7
        %v1013 = vsub.s32 3, %v1012
        %v1014 = vrot.slane %v950, %v1013
        %v1015 = vmul.f32 %v1005, %v1010
        %v1016 = vmul.f32 %v1005, %v1014
        %v1017 = vadd.f32 %v1000, %v1015
        %v1018 = vadd.f32 %v1001, %v1016
        %1019 = vrot.lane.b32.xlu0 %v358, 113
        %v1020 = vpop.permute.xlu0 %1019
        %1021 = vrot.lane.b32.xlu0 %v418, 113
        %v1022 = vpop.permute.xlu0 %1021
        %vm1023 = vcmp.lt.s32.totalorder %v425, 113
        %v1024 = vsel %vm1023, %v1020, %v1022
        %v1025 = vsel %vm1023, %v1022, %v1020
        %vm1026 = vmand %vm626, %vm433
        %v1027 = vsel %vm1026, 1, 0
        %v1028 = vlaneseq
        %v1029 = vshrl.u32 %v1028, 7
        %v1030 = vsub.s32 0, %v1029
        %v1031 = vrot.slane %v1027, %v1030
        %v1032 = vlaneseq
        %v1033 = vshrl.u32 %v1032, 7
        %v1034 = vsub.s32 2, %v1033
        %v1035 = vrot.slane %v1027, %v1034
        %v1036 = vlaneseq
        %v1037 = vshrl.u32 %v1036, 7
        %v1038 = vsub.s32 0, %v1037
        %v1039 = vrot.slane %v1031, %v1038
        %v1040 = vlaneseq
        %v1041 = vshrl.u32 %v1040, 7
        %v1042 = vsub.s32 0, %v1041
        %v1043 = vrot.slane %v1035, %v1042
        %vm1044 = vcmp.eq.s32.totalorder %v1039, 1
        %vm1045 = vcmp.eq.s32.totalorder %v1043, 1
        %v1046 = vsel %vm1044, %v1024, 0.0
        %v1047 = vsel %vm1045, %v1025, 0.0
        %1049 = vset.pattern.permute.xlu0 0
        %1050 = vperm.xlu0 %1049, %v384
        %v1051 = vpop.permute.xlu0 %1050
        %v1053 = vlaneseq
        %v1054 = vshrl.u32 %v1053, 7
        %v1055 = vsub.s32 0, %v1054
        %v1056 = vrot.slane %v1046, %v1055
        %v1057 = vlaneseq
        %v1058 = vshrl.u32 %v1057, 7
        %v1059 = vsub.s32 0, %v1058
        %v1060 = vrot.slane %v1047, %v1059
        %v1061 = vmul.f32 %v1051, %v1056
        %v1062 = vmul.f32 %v1051, %v1060
        %v1063 = vadd.f32 %v1017, %v1061
        %v1064 = vadd.f32 %v1018, %v1062
        %1066 = vset.pattern.permute.xlu0 0
        %1067 = vperm.xlu0 %1066, %v385
        %v1068 = vpop.permute.xlu0 %1067
        %v1070 = vlaneseq
        %v1071 = vshrl.u32 %v1070, 7
        %v1072 = vsub.s32 1, %v1071
        %v1073 = vrot.slane %v1046, %v1072
        %v1074 = vlaneseq
        %v1075 = vshrl.u32 %v1074, 7
        %v1076 = vsub.s32 1, %v1075
        %v1077 = vrot.slane %v1047, %v1076
        %v1078 = vmul.f32 %v1068, %v1073
        %v1079 = vmul.f32 %v1068, %v1077
        %v1080 = vadd.f32 %v1063, %v1078
        %v1081 = vadd.f32 %v1064, %v1079
        %1083 = vset.pattern.permute.xlu0 0
        %1084 = vperm.xlu0 %1083, %v386
        %v1085 = vpop.permute.xlu0 %1084
        %v1087 = vlaneseq
        %v1088 = vshrl.u32 %v1087, 7
        %v1089 = vsub.s32 2, %v1088
        %v1090 = vrot.slane %v1046, %v1089
        %v1091 = vlaneseq
        %v1092 = vshrl.u32 %v1091, 7
        %v1093 = vsub.s32 2, %v1092
        %v1094 = vrot.slane %v1047, %v1093
        %v1095 = vmul.f32 %v1085, %v1090
        %v1096 = vmul.f32 %v1085, %v1094
        %v1097 = vadd.f32 %v1080, %v1095
        %v1098 = vadd.f32 %v1081, %v1096
        %1100 = vset.pattern.permute.xlu0 0
        %1101 = vperm.xlu0 %1100, %v387
        %v1102 = vpop.permute.xlu0 %1101
        %v1104 = vlaneseq
        %v1105 = vshrl.u32 %v1104, 7
        %v1106 = vsub.s32 3, %v1105
        %v1107 = vrot.slane %v1046, %v1106
        %v1108 = vlaneseq
        %v1109 = vshrl.u32 %v1108, 7
        %v1110 = vsub.s32 3, %v1109
        %v1111 = vrot.slane %v1047, %v1110
        %v1112 = vmul.f32 %v1102, %v1107
        %v1113 = vmul.f32 %v1102, %v1111
        %v1114 = vadd.f32 %v1097, %v1112
        %v1115 = vadd.f32 %v1098, %v1113
        %1116 = vrot.lane.b32.xlu0 %v358, 112
        %v1117 = vpop.permute.xlu0 %1116
        %1118 = vrot.lane.b32.xlu0 %v418, 112
        %v1119 = vpop.permute.xlu0 %1118
        %vm1120 = vcmp.lt.s32.totalorder %v425, 112
        %v1121 = vsel %vm1120, %v1117, %v1119
        %v1122 = vsel %vm1120, %v1119, %v1117
        %v1123 = vlaneseq
        %v1124 = vshrl.u32 %v1123, 7
        %v1125 = vsub.s32 0, %v1124
        %v1126 = vrot.slane %v627, %v1125
        %v1127 = vlaneseq
        %v1128 = vshrl.u32 %v1127, 7
        %v1129 = vsub.s32 2, %v1128
        %v1130 = vrot.slane %v627, %v1129
        %v1131 = vlaneseq
        %v1132 = vshrl.u32 %v1131, 7
        %v1133 = vsub.s32 0, %v1132
        %v1134 = vrot.slane %v1126, %v1133
        %v1135 = vlaneseq
        %v1136 = vshrl.u32 %v1135, 7
        %v1137 = vsub.s32 0, %v1136
        %v1138 = vrot.slane %v1130, %v1137
        %vm1139 = vcmp.eq.s32.totalorder %v1134, 1
        %vm1140 = vcmp.eq.s32.totalorder %v1138, 1
        %v1141 = vsel %vm1139, %v1121, 0.0
        %v1142 = vsel %vm1140, %v1122, 0.0
        %1144 = vset.pattern.permute.xlu0 0
        %1145 = vperm.xlu0 %1144, %v388
        %v1146 = vpop.permute.xlu0 %1145
        %v1148 = vlaneseq
        %v1149 = vshrl.u32 %v1148, 7
        %v1150 = vsub.s32 0, %v1149
        %v1151 = vrot.slane %v1141, %v1150
        %v1152 = vlaneseq
        %v1153 = vshrl.u32 %v1152, 7
        %v1154 = vsub.s32 0, %v1153
        %v1155 = vrot.slane %v1142, %v1154
        %v1156 = vmul.f32 %v1146, %v1151
        %v1157 = vmul.f32 %v1146, %v1155
        %v1158 = vadd.f32 %v1114, %v1156
        %v1159 = vadd.f32 %v1115, %v1157
        %1161 = vset.pattern.permute.xlu0 0
        %1162 = vperm.xlu0 %1161, %v389
        %v1163 = vpop.permute.xlu0 %1162
        %v1165 = vlaneseq
        %v1166 = vshrl.u32 %v1165, 7
        %v1167 = vsub.s32 1, %v1166
        %v1168 = vrot.slane %v1141, %v1167
        %v1169 = vlaneseq
        %v1170 = vshrl.u32 %v1169, 7
        %v1171 = vsub.s32 1, %v1170
        %v1172 = vrot.slane %v1142, %v1171
        %v1173 = vmul.f32 %v1163, %v1168
        %v1174 = vmul.f32 %v1163, %v1172
        %v1175 = vadd.f32 %v1158, %v1173
        %v1176 = vadd.f32 %v1159, %v1174
        %1178 = vset.pattern.permute.xlu0 0
        %1179 = vperm.xlu0 %1178, %v390
        %v1180 = vpop.permute.xlu0 %1179
        %v1182 = vlaneseq
        %v1183 = vshrl.u32 %v1182, 7
        %v1184 = vsub.s32 2, %v1183
        %v1185 = vrot.slane %v1141, %v1184
        %v1186 = vlaneseq
        %v1187 = vshrl.u32 %v1186, 7
        %v1188 = vsub.s32 2, %v1187
        %v1189 = vrot.slane %v1142, %v1188
        %v1190 = vmul.f32 %v1180, %v1185
        %v1191 = vmul.f32 %v1180, %v1189
        %v1192 = vadd.f32 %v1175, %v1190
        %v1193 = vadd.f32 %v1176, %v1191
        %1195 = vset.pattern.permute.xlu0 0
        %1196 = vperm.xlu0 %1195, %v391
        %v1197 = vpop.permute.xlu0 %1196
        %v1199 = vlaneseq
        %v1200 = vshrl.u32 %v1199, 7
        %v1201 = vsub.s32 3, %v1200
        %v1202 = vrot.slane %v1141, %v1201
        %v1203 = vlaneseq
        %v1204 = vshrl.u32 %v1203, 7
        %v1205 = vsub.s32 3, %v1204
        %v1206 = vrot.slane %v1142, %v1205
        %v1207 = vmul.f32 %v1197, %v1202
        %v1208 = vmul.f32 %v1197, %v1206
        %v1209 = vadd.f32 %v1192, %v1207
        %v1210 = vadd.f32 %v1193, %v1208
        %1211 = vrot.lane.b32.xlu0 %v358, 111
        %v1212 = vpop.permute.xlu0 %1211
        %1213 = vrot.lane.b32.xlu0 %v418, 111
        %v1214 = vpop.permute.xlu0 %1213
        %vm1215 = vcmp.lt.s32.totalorder %v425, 111
        %v1216 = vsel %vm1215, %v1212, %v1214
        %v1217 = vsel %vm1215, %v1214, %v1212
        %vm1218 = vmand %vm626, %vm630
        %v1219 = vsel %vm1218, 1, 0
        %v1220 = vlaneseq
        %v1221 = vshrl.u32 %v1220, 7
        %v1222 = vsub.s32 0, %v1221
        %v1223 = vrot.slane %v1219, %v1222
        %v1224 = vlaneseq
        %v1225 = vshrl.u32 %v1224, 7
        %v1226 = vsub.s32 2, %v1225
        %v1227 = vrot.slane %v1219, %v1226
        %v1228 = vlaneseq
        %v1229 = vshrl.u32 %v1228, 7
        %v1230 = vsub.s32 0, %v1229
        %v1231 = vrot.slane %v1223, %v1230
        %v1232 = vlaneseq
        %v1233 = vshrl.u32 %v1232, 7
        %v1234 = vsub.s32 0, %v1233
        %v1235 = vrot.slane %v1227, %v1234
        %vm1236 = vcmp.eq.s32.totalorder %v1231, 1
        %vm1237 = vcmp.eq.s32.totalorder %v1235, 1
        %v1238 = vsel %vm1236, %v1216, 0.0
        %v1239 = vsel %vm1237, %v1217, 0.0
        %1241 = vset.pattern.permute.xlu0 0
        %1242 = vperm.xlu0 %1241, %v392
        %v1243 = vpop.permute.xlu0 %1242
        %v1245 = vlaneseq
        %v1246 = vshrl.u32 %v1245, 7
        %v1247 = vsub.s32 0, %v1246
        %v1248 = vrot.slane %v1238, %v1247
        %v1249 = vlaneseq
        %v1250 = vshrl.u32 %v1249, 7
        %v1251 = vsub.s32 0, %v1250
        %v1252 = vrot.slane %v1239, %v1251
        %v1253 = vmul.f32 %v1243, %v1248
        %v1254 = vmul.f32 %v1243, %v1252
        %v1255 = vadd.f32 %v1209, %v1253
        %v1256 = vadd.f32 %v1210, %v1254
        %1258 = vset.pattern.permute.xlu0 0
        %1259 = vperm.xlu0 %1258, %v393
        %v1260 = vpop.permute.xlu0 %1259
        %v1262 = vlaneseq
        %v1263 = vshrl.u32 %v1262, 7
        %v1264 = vsub.s32 1, %v1263
        %v1265 = vrot.slane %v1238, %v1264
        %v1266 = vlaneseq
        %v1267 = vshrl.u32 %v1266, 7
        %v1268 = vsub.s32 1, %v1267
        %v1269 = vrot.slane %v1239, %v1268
        %v1270 = vmul.f32 %v1260, %v1265
        %v1271 = vmul.f32 %v1260, %v1269
        %v1272 = vadd.f32 %v1255, %v1270
        %v1273 = vadd.f32 %v1256, %v1271
        %1275 = vset.pattern.permute.xlu0 0
        %1276 = vperm.xlu0 %1275, %v394
        %v1277 = vpop.permute.xlu0 %1276
        %v1279 = vlaneseq
        %v1280 = vshrl.u32 %v1279, 7
        %v1281 = vsub.s32 2, %v1280
        %v1282 = vrot.slane %v1238, %v1281
        %v1283 = vlaneseq
        %v1284 = vshrl.u32 %v1283, 7
        %v1285 = vsub.s32 2, %v1284
        %v1286 = vrot.slane %v1239, %v1285
        %v1287 = vmul.f32 %v1277, %v1282
        %v1288 = vmul.f32 %v1277, %v1286
        %v1289 = vadd.f32 %v1272, %v1287
        %v1290 = vadd.f32 %v1273, %v1288
        %1292 = vset.pattern.permute.xlu0 0
        %1293 = vperm.xlu0 %1292, %v395
        %v1294 = vpop.permute.xlu0 %1293
        %v1296 = vlaneseq
        %v1297 = vshrl.u32 %v1296, 7
        %v1298 = vsub.s32 3, %v1297
        %v1299 = vrot.slane %v1238, %v1298
        %v1300 = vlaneseq
        %v1301 = vshrl.u32 %v1300, 7
        %v1302 = vsub.s32 3, %v1301
        %v1303 = vrot.slane %v1239, %v1302
        %v1304 = vmul.f32 %v1294, %v1299
        %v1305 = vmul.f32 %v1294, %v1303
        %v1306 = vadd.f32 %v1289, %v1304
        %v1307 = vadd.f32 %v1290, %v1305
        %v1308 = vld [vmem:[%s3] sm:$0xf]
        %1310 = vset.pattern.permute.xlu0 0
        %1311 = vperm.xlu0 %1310, %v1308
        %v1312 = vpop.permute.xlu0 %1311
        %v1314 = vadd.f32 %v1306, %v1312
        %v1315 = vadd.f32 %v1307, %v1312
        %vm1316 = vcmp.eq.s32.totalorder %v359, 0
        %vm1317 = vcmp.eq.s32.totalorder %v359, 15
        %vm1318 = vmor %vm1316, %vm1317
        %v1319 = vlaneseq
        %v1320 = vshrl.u32 %v1319, 7
        %vm1321 = vcmp.lt.s32.totalorder %v1320, 2
        %v1322 = vsel %vm1321, 1, 0
        %vm1323 = vcmp.eq.s32.totalorder %v1322, 1
        %v1324 = vsel %vm1318, 1, 0
        %v1325 = vlaneseq
        %v1326 = vshrl.u32 %v1325, 7
        %v1327 = vsub.s32 0, %v1326
        %v1328 = vrot.slane %v1324, %v1327
        %v1329 = vlaneseq
        %v1330 = vshrl.u32 %v1329, 7
        %v1331 = vsub.s32 2, %v1330
        %v1332 = vrot.slane %v1324, %v1331
        %v1333 = vlaneseq
        %v1334 = vshrl.u32 %v1333, 7
        %v1335 = vsub.s32 0, %v1334
        %v1336 = vrot.slane %v1328, %v1335
        %v1337 = vlaneseq
        %v1338 = vshrl.u32 %v1337, 7
        %v1339 = vsub.s32 0, %v1338
        %v1340 = vrot.slane %v1332, %v1339
        %vm1341 = vcmp.eq.s32.totalorder %v1336, 1
        %vm1342 = vcmp.eq.s32.totalorder %v1340, 1
        %vm1343 = vmand %vm1323, %vm1341
        %vm1344 = vmand %vm1323, %vm1342
        %vm1345 = vmxor %vm1321, 1
        %v1346 = vsel %vm1345, 1, 0
        %vm1347 = vcmp.eq.s32.totalorder %v1346, 1
        %v1348 = vlaneseq
        %v1349 = vshrl.u32 %v1348, 7
        %v1350 = vsub.s32 1, %v1349
        %v1351 = vrot.slane %v1324, %v1350
        %v1352 = vlaneseq
        %v1353 = vshrl.u32 %v1352, 7
        %v1354 = vsub.s32 3, %v1353
        %v1355 = vrot.slane %v1324, %v1354
        %v1356 = vlaneseq
        %v1357 = vshrl.u32 %v1356, 7
        %v1358 = vsub.s32 1, %v1357
        %v1359 = vrot.slane %v1351, %v1358
        %v1360 = vlaneseq
        %v1361 = vshrl.u32 %v1360, 7
        %v1362 = vsub.s32 1, %v1361
        %v1363 = vrot.slane %v1355, %v1362
        %vm1364 = vcmp.eq.s32.totalorder %v1359, 1
        %vm1365 = vcmp.eq.s32.totalorder %v1363, 1
        %vm1366 = vmand %vm1347, %vm1364
        %vm1367 = vmand %vm1347, %vm1365
        %vm1368 = vmor %vm1343, %vm1366
        %vm1369 = vmor %vm1344, %vm1367
        %v1370 = vld [vmem:[%s4] sm:$0xf]
        %1372 = vset.pattern.permute.xlu0 0
        %1373 = vperm.xlu0 %1372, %v1370
        %v1374 = vpop.permute.xlu0 %1373
        %v1376 = vsel %vm1368, %v1374, %v1314
        %v1377 = vsel %vm1369, %v1374, %v1315
        %1378 = vrot.lane.b32.xlu0 %v1376, 34
        %v1379 = vpop.permute.xlu0 %1378
        %1380 = vrot.lane.b32.xlu0 %v1377, 34
        %v1381 = vpop.permute.xlu0 %1380
        %vm1382 = vcmp.lt.s32.totalorder %v425, 34
        %v1383 = vsel %vm1382, %v1379, %v1381
        %v1384 = vsel %vm1382, %v1381, %v1379
        %vm1385 = vcmp.ge.s32.totalorder %v359, 2
        %v1386 = vsel %vm1385, 1, 0
        %v1387 = vrot.slane %v1386, 7
        %v1388 = vrot.slane %v1387, 2
        %vm1389 = vcmp.ne.s32.totalorder %v1388, 0
        %vm1390 = vmand %vm1385, %vm1389
        %v1391 = vsel %vm1390, 1, 0
        %v1392 = vlaneseq
        %v1393 = vshrl.u32 %v1392, 7
        %v1394 = vsub.s32 0, %v1393
        %v1395 = vrot.slane %v1391, %v1394
        %v1396 = vlaneseq
        %v1397 = vshrl.u32 %v1396, 7
        %v1398 = vsub.s32 2, %v1397
        %v1399 = vrot.slane %v1391, %v1398
        %v1400 = vlaneseq
        %v1401 = vshrl.u32 %v1400, 7
        %v1402 = vsub.s32 0, %v1401
        %v1403 = vrot.slane %v1395, %v1402
        %v1404 = vlaneseq
        %v1405 = vshrl.u32 %v1404, 7
        %v1406 = vsub.s32 0, %v1405
        %v1407 = vrot.slane %v1399, %v1406
        %vm1408 = vcmp.eq.s32.totalorder %v1403, 1
        %vm1409 = vcmp.eq.s32.totalorder %v1407, 1
        %v1410 = vsel %vm1408, %v1384, 0.0
        %v1411 = vsel %vm1409, %v1383, 0.0
        %1413 = vset.pattern.permute.xlu0 0
        %1414 = vperm.xlu0 %1413, %v396
        %v1415 = vpop.permute.xlu0 %1414
        %v1417 = vmul.f32 %v1415, %v1410
        %v1418 = vmul.f32 %v1415, %v1411
        %v1419 = vadd.f32 %v1417, 0.0
        %v1420 = vadd.f32 %v1418, 0.0
        %1421 = vrot.lane.b32.xlu0 %v1376, 32
        %v1422 = vpop.permute.xlu0 %1421
        %1423 = vrot.lane.b32.xlu0 %v1377, 32
        %v1424 = vpop.permute.xlu0 %1423
        %vm1425 = vcmp.lt.s32.totalorder %v425, 32
        %v1426 = vsel %vm1425, %v1422, %v1424
        %v1427 = vsel %vm1425, %v1424, %v1422
        %v1428 = vlaneseq
        %v1429 = vshrl.u32 %v1428, 7
        %v1430 = vsub.s32 0, %v1429
        %v1431 = vrot.slane %v1386, %v1430
        %v1432 = vlaneseq
        %v1433 = vshrl.u32 %v1432, 7
        %v1434 = vsub.s32 2, %v1433
        %v1435 = vrot.slane %v1386, %v1434
        %v1436 = vlaneseq
        %v1437 = vshrl.u32 %v1436, 7
        %v1438 = vsub.s32 0, %v1437
        %v1439 = vrot.slane %v1431, %v1438
        %v1440 = vlaneseq
        %v1441 = vshrl.u32 %v1440, 7
        %v1442 = vsub.s32 0, %v1441
        %v1443 = vrot.slane %v1435, %v1442
        %vm1444 = vcmp.eq.s32.totalorder %v1439, 1
        %vm1445 = vcmp.eq.s32.totalorder %v1443, 1
        %v1446 = vsel %vm1444, %v1427, 0.0
        %v1447 = vsel %vm1445, %v1426, 0.0
        %1449 = vset.pattern.permute.xlu0 0
        %1450 = vperm.xlu0 %1449, %v397
        %v1451 = vpop.permute.xlu0 %1450
        %v1453 = vmul.f32 %v1451, %v1446
        %v1454 = vmul.f32 %v1451, %v1447
        %v1455 = vadd.f32 %v1419, %v1453
        %v1456 = vadd.f32 %v1420, %v1454
        %1457 = vrot.lane.b32.xlu0 %v1376, 30
        %v1458 = vpop.permute.xlu0 %1457
        %1459 = vrot.lane.b32.xlu0 %v1377, 30
        %v1460 = vpop.permute.xlu0 %1459
        %vm1461 = vcmp.lt.s32.totalorder %v425, 30
        %v1462 = vsel %vm1461, %v1458, %v1460
        %v1463 = vsel %vm1461, %v1460, %v1458
        %vm1464 = vcmp.lt.s32.totalorder %v359, 14
        %v1465 = vsel %vm1464, 1, 0
        %v1466 = vrot.slane %v1465, 7
        %v1467 = vrot.slane %v1466, 2
        %vm1468 = vcmp.ne.s32.totalorder %v1467, 0
        %vm1469 = vmand %vm1385, %vm1468
        %v1470 = vsel %vm1469, 1, 0
        %v1471 = vlaneseq
        %v1472 = vshrl.u32 %v1471, 7
        %v1473 = vsub.s32 0, %v1472
        %v1474 = vrot.slane %v1470, %v1473
        %v1475 = vlaneseq
        %v1476 = vshrl.u32 %v1475, 7
        %v1477 = vsub.s32 2, %v1476
        %v1478 = vrot.slane %v1470, %v1477
        %v1479 = vlaneseq
        %v1480 = vshrl.u32 %v1479, 7
        %v1481 = vsub.s32 0, %v1480
        %v1482 = vrot.slane %v1474, %v1481
        %v1483 = vlaneseq
        %v1484 = vshrl.u32 %v1483, 7
        %v1485 = vsub.s32 0, %v1484
        %v1486 = vrot.slane %v1478, %v1485
        %vm1487 = vcmp.eq.s32.totalorder %v1482, 1
        %vm1488 = vcmp.eq.s32.totalorder %v1486, 1
        %v1489 = vsel %vm1487, %v1463, 0.0
        %v1490 = vsel %vm1488, %v1462, 0.0
        %1492 = vset.pattern.permute.xlu0 0
        %1493 = vperm.xlu0 %1492, %v398
        %v1494 = vpop.permute.xlu0 %1493
        %v1496 = vmul.f32 %v1494, %v1489
        %v1497 = vmul.f32 %v1494, %v1490
        %v1498 = vadd.f32 %v1455, %v1496
        %v1499 = vadd.f32 %v1456, %v1497
        %1500 = vrot.lane.b32.xlu0 %v1376, 2
        %v1501 = vpop.permute.xlu0 %1500
        %1502 = vrot.lane.b32.xlu0 %v1377, 2
        %v1503 = vpop.permute.xlu0 %1502
        %vm1504 = vcmp.lt.s32.totalorder %v425, 2
        %v1505 = vsel %vm1504, %v1501, %v1503
        %v1506 = vsel %vm1504, %v1503, %v1501
        %v1507 = vlaneseq
        %v1508 = vshrl.u32 %v1507, 7
        %v1509 = vsub.s32 1, %v1508
        %v1510 = vrot.slane %v1386, %v1509
        %v1511 = vlaneseq
        %v1512 = vshrl.u32 %v1511, 7
        %v1513 = vsub.s32 3, %v1512
        %v1514 = vrot.slane %v1386, %v1513
        %v1515 = vlaneseq
        %v1516 = vshrl.u32 %v1515, 7
        %v1517 = vsub.s32 1, %v1516
        %v1518 = vrot.slane %v1510, %v1517
        %v1519 = vlaneseq
        %v1520 = vshrl.u32 %v1519, 7
        %v1521 = vsub.s32 1, %v1520
        %v1522 = vrot.slane %v1514, %v1521
        %vm1523 = vcmp.eq.s32.totalorder %v1518, 1
        %vm1524 = vcmp.eq.s32.totalorder %v1522, 1
        %v1525 = vsel %vm1523, %v1506, 0.0
        %v1526 = vsel %vm1524, %v1505, 0.0
        %1528 = vset.pattern.permute.xlu0 0
        %1529 = vperm.xlu0 %1528, %v399
        %v1530 = vpop.permute.xlu0 %1529
        %v1532 = vmul.f32 %v1530, %v1525
        %v1533 = vmul.f32 %v1530, %v1526
        %v1534 = vadd.f32 %v1498, %v1532
        %v1535 = vadd.f32 %v1499, %v1533
        %1537 = vset.pattern.permute.xlu0 0
        %1538 = vperm.xlu0 %1537, %v400
        %v1539 = vpop.permute.xlu0 %1538
        %v1541 = vmul.f32 %v1539, %v1376
        %v1542 = vmul.f32 %v1539, %v1377
        %v1543 = vadd.f32 %v1534, %v1541
        %v1544 = vadd.f32 %v1535, %v1542
        %1545 = vrot.lane.b32.xlu0 %v1376, 126
        %v1546 = vpop.permute.xlu0 %1545
        %1547 = vrot.lane.b32.xlu0 %v1377, 126
        %v1548 = vpop.permute.xlu0 %1547
        %vm1549 = vcmp.lt.s32.totalorder %v425, 126
        %v1550 = vsel %vm1549, %v1546, %v1548
        %v1551 = vsel %vm1549, %v1548, %v1546
        %v1552 = vlaneseq
        %v1553 = vshrl.u32 %v1552, 7
        %v1554 = vsub.s32 1, %v1553
        %v1555 = vrot.slane %v1465, %v1554
        %v1556 = vlaneseq
        %v1557 = vshrl.u32 %v1556, 7
        %v1558 = vsub.s32 3, %v1557
        %v1559 = vrot.slane %v1465, %v1558
        %v1560 = vlaneseq
        %v1561 = vshrl.u32 %v1560, 7
        %v1562 = vsub.s32 1, %v1561
        %v1563 = vrot.slane %v1555, %v1562
        %v1564 = vlaneseq
        %v1565 = vshrl.u32 %v1564, 7
        %v1566 = vsub.s32 1, %v1565
        %v1567 = vrot.slane %v1559, %v1566
        %vm1568 = vcmp.eq.s32.totalorder %v1563, 1
        %vm1569 = vcmp.eq.s32.totalorder %v1567, 1
        %v1570 = vsel %vm1568, %v1550, 0.0
        %v1571 = vsel %vm1569, %v1551, 0.0
        %1573 = vset.pattern.permute.xlu0 0
        %1574 = vperm.xlu0 %1573, %v401
        %v1575 = vpop.permute.xlu0 %1574
        %v1577 = vmul.f32 %v1575, %v1570
        %v1578 = vmul.f32 %v1575, %v1571
        %v1579 = vadd.f32 %v1543, %v1577
        %v1580 = vadd.f32 %v1544, %v1578
        %1581 = vrot.lane.b32.xlu0 %v1376, 98
        %v1582 = vpop.permute.xlu0 %1581
        %1583 = vrot.lane.b32.xlu0 %v1377, 98
        %v1584 = vpop.permute.xlu0 %1583
        %vm1585 = vcmp.lt.s32.totalorder %v425, 98
        %v1586 = vsel %vm1585, %v1582, %v1584
        %v1587 = vsel %vm1585, %v1584, %v1582
        %vm1588 = vmand %vm1464, %vm1389
        %v1589 = vsel %vm1588, 1, 0
        %v1590 = vlaneseq
        %v1591 = vshrl.u32 %v1590, 7
        %v1592 = vsub.s32 0, %v1591
        %v1593 = vrot.slane %v1589, %v1592
        %v1594 = vlaneseq
        %v1595 = vshrl.u32 %v1594, 7
        %v1596 = vsub.s32 2, %v1595
        %v1597 = vrot.slane %v1589, %v1596
        %v1598 = vlaneseq
        %v1599 = vshrl.u32 %v1598, 7
        %v1600 = vsub.s32 0, %v1599
        %v1601 = vrot.slane %v1593, %v1600
        %v1602 = vlaneseq
        %v1603 = vshrl.u32 %v1602, 7
        %v1604 = vsub.s32 0, %v1603
        %v1605 = vrot.slane %v1597, %v1604
        %vm1606 = vcmp.eq.s32.totalorder %v1601, 1
        %vm1607 = vcmp.eq.s32.totalorder %v1605, 1
        %v1608 = vsel %vm1606, %v1586, 0.0
        %v1609 = vsel %vm1607, %v1587, 0.0
        %1611 = vset.pattern.permute.xlu0 0
        %1612 = vperm.xlu0 %1611, %v402
        %v1613 = vpop.permute.xlu0 %1612
        %v1615 = vmul.f32 %v1613, %v1608
        %v1616 = vmul.f32 %v1613, %v1609
        %v1617 = vadd.f32 %v1579, %v1615
        %v1618 = vadd.f32 %v1580, %v1616
        %1619 = vrot.lane.b32.xlu0 %v1376, 96
        %v1620 = vpop.permute.xlu0 %1619
        %1621 = vrot.lane.b32.xlu0 %v1377, 96
        %v1622 = vpop.permute.xlu0 %1621
        %vm1623 = vcmp.lt.s32.totalorder %v425, 96
        %v1624 = vsel %vm1623, %v1620, %v1622
        %v1625 = vsel %vm1623, %v1622, %v1620
        %v1626 = vlaneseq
        %v1627 = vshrl.u32 %v1626, 7
        %v1628 = vsub.s32 0, %v1627
        %v1629 = vrot.slane %v1465, %v1628
        %v1630 = vlaneseq
        %v1631 = vshrl.u32 %v1630, 7
        %v1632 = vsub.s32 2, %v1631
        %v1633 = vrot.slane %v1465, %v1632
        %v1634 = vlaneseq
        %v1635 = vshrl.u32 %v1634, 7
        %v1636 = vsub.s32 0, %v1635
        %v1637 = vrot.slane %v1629, %v1636
        %v1638 = vlaneseq
        %v1639 = vshrl.u32 %v1638, 7
        %v1640 = vsub.s32 0, %v1639
        %v1641 = vrot.slane %v1633, %v1640
        %vm1642 = vcmp.eq.s32.totalorder %v1637, 1
        %vm1643 = vcmp.eq.s32.totalorder %v1641, 1
        %v1644 = vsel %vm1642, %v1624, 0.0
        %v1645 = vsel %vm1643, %v1625, 0.0
        %1647 = vset.pattern.permute.xlu0 0
        %1648 = vperm.xlu0 %1647, %v403
        %v1649 = vpop.permute.xlu0 %1648
        %v1651 = vmul.f32 %v1649, %v1644
        %v1652 = vmul.f32 %v1649, %v1645
        %v1653 = vadd.f32 %v1617, %v1651
        %v1654 = vadd.f32 %v1618, %v1652
        %1655 = vrot.lane.b32.xlu0 %v1376, 94
        %v1656 = vpop.permute.xlu0 %1655
        %1657 = vrot.lane.b32.xlu0 %v1377, 94
        %v1658 = vpop.permute.xlu0 %1657
        %vm1659 = vcmp.lt.s32.totalorder %v425, 94
        %v1660 = vsel %vm1659, %v1656, %v1658
        %v1661 = vsel %vm1659, %v1658, %v1656
        %vm1662 = vmand %vm1464, %vm1468
        %v1663 = vsel %vm1662, 1, 0
        %v1664 = vlaneseq
        %v1665 = vshrl.u32 %v1664, 7
        %v1666 = vsub.s32 0, %v1665
        %v1667 = vrot.slane %v1663, %v1666
        %v1668 = vlaneseq
        %v1669 = vshrl.u32 %v1668, 7
        %v1670 = vsub.s32 2, %v1669
        %v1671 = vrot.slane %v1663, %v1670
        %v1672 = vlaneseq
        %v1673 = vshrl.u32 %v1672, 7
        %v1674 = vsub.s32 0, %v1673
        %v1675 = vrot.slane %v1667, %v1674
        %v1676 = vlaneseq
        %v1677 = vshrl.u32 %v1676, 7
        %v1678 = vsub.s32 0, %v1677
        %v1679 = vrot.slane %v1671, %v1678
        %vm1680 = vcmp.eq.s32.totalorder %v1675, 1
        %vm1681 = vcmp.eq.s32.totalorder %v1679, 1
        %v1682 = vsel %vm1680, %v1660, 0.0
        %v1683 = vsel %vm1681, %v1661, 0.0
        %1685 = vset.pattern.permute.xlu0 0
        %1686 = vperm.xlu0 %1685, %v404
        %v1687 = vpop.permute.xlu0 %1686
        %v1689 = vmul.f32 %v1687, %v1682
        %v1690 = vmul.f32 %v1687, %v1683
        %v1691 = vadd.f32 %v1653, %v1689
        %v1692 = vadd.f32 %v1654, %v1690
        %1694 = vset.pattern.permute.xlu0 0
        %1695 = vperm.xlu0 %1694, %v405
        %v1696 = vpop.permute.xlu0 %1695
        %v1698 = vlaneseq
        %v1699 = vshrl.u32 %v1698, 7
        %v1700 = vsub.s32 0, %v1699
        %v1701 = vrot.slane %v1691, %v1700
        %v1702 = vlaneseq
        %v1703 = vshrl.u32 %v1702, 7
        %v1704 = vsub.s32 0, %v1703
        %v1705 = vrot.slane %v1692, %v1704
        %v1706 = vmul.f32 %v1696, %v1701
        %v1707 = vmul.f32 %v1696, %v1705
        %v1708 = vadd.f32 %v1706, 0.0
        %v1709 = vadd.f32 %v1707, 0.0
        %1711 = vset.pattern.permute.xlu0 0
        %1712 = vperm.xlu0 %1711, %v406
        %v1713 = vpop.permute.xlu0 %1712
        %v1715 = vlaneseq
        %v1716 = vshrl.u32 %v1715, 7
        %v1717 = vsub.s32 1, %v1716
        %v1718 = vrot.slane %v1691, %v1717
        %v1719 = vlaneseq
        %v1720 = vshrl.u32 %v1719, 7
        %v1721 = vsub.s32 1, %v1720
        %v1722 = vrot.slane %v1692, %v1721
        %v1723 = vmul.f32 %v1713, %v1718
        %v1724 = vmul.f32 %v1713, %v1722
        %v1725 = vadd.f32 %v1708, %v1723
        %v1726 = vadd.f32 %v1709, %v1724
        %1728 = vset.pattern.permute.xlu0 0
        %1729 = vperm.xlu0 %1728, %v407
        %v1730 = vpop.permute.xlu0 %1729
        %v1732 = vlaneseq
        %v1733 = vshrl.u32 %v1732, 7
        %v1734 = vsub.s32 2, %v1733
        %v1735 = vrot.slane %v1691, %v1734
        %v1736 = vlaneseq
        %v1737 = vshrl.u32 %v1736, 7
        %v1738 = vsub.s32 2, %v1737
        %v1739 = vrot.slane %v1692, %v1738
        %v1740 = vmul.f32 %v1730, %v1735
        %v1741 = vmul.f32 %v1730, %v1739
        %v1742 = vadd.f32 %v1725, %v1740
        %v1743 = vadd.f32 %v1726, %v1741
        %1745 = vset.pattern.permute.xlu0 0
        %1746 = vperm.xlu0 %1745, %v408
        %v1747 = vpop.permute.xlu0 %1746
        %v1749 = vlaneseq
        %v1750 = vshrl.u32 %v1749, 7
        %v1751 = vsub.s32 3, %v1750
        %v1752 = vrot.slane %v1691, %v1751
        %v1753 = vlaneseq
        %v1754 = vshrl.u32 %v1753, 7
        %v1755 = vsub.s32 3, %v1754
        %v1756 = vrot.slane %v1692, %v1755
        %v1757 = vmul.f32 %v1747, %v1752
        %v1758 = vmul.f32 %v1747, %v1756
        %v1759 = vadd.f32 %v1742, %v1757
        %v1760 = vadd.f32 %v1743, %v1758
        %v1761 = vld [vmem:[%s7] sm:$0xf]
        %1763 = vset.pattern.permute.xlu0 0
        %1764 = vperm.xlu0 %1763, %v1761
        %v1765 = vpop.permute.xlu0 %1764
        %v1767 = vadd.f32 %v1759, %v1765
        %v1768 = vadd.f32 %v1760, %v1765
        %v1769 = vmax.f32 %v1767, 0.0
        %v1770 = vmax.f32 %v1768, 0.0
        %1772 = vset.pattern.permute.xlu0 0
        %1773 = vperm.xlu0 %1772, %v409
        %v1774 = vpop.permute.xlu0 %1773
        %v1776 = vlaneseq
        %v1777 = vshrl.u32 %v1776, 7
        %v1778 = vsub.s32 0, %v1777
        %v1779 = vrot.slane %v1769, %v1778
        %v1780 = vlaneseq
        %v1781 = vshrl.u32 %v1780, 7
        %v1782 = vsub.s32 0, %v1781
        %v1783 = vrot.slane %v1770, %v1782
        %v1784 = vmul.f32 %v1774, %v1779
        %v1785 = vmul.f32 %v1774, %v1783
        %v1786 = vadd.f32 %v1784, 0.0
        %v1787 = vadd.f32 %v1785, 0.0
        %1789 = vset.pattern.permute.xlu0 0
        %1790 = vperm.xlu0 %1789, %v413
        %v1791 = vpop.permute.xlu0 %1790
        %v1793 = vmul.f32 %v1791, %v834
        %v1794 = vmul.f32 %v1791, %v838
        %v1795 = vadd.f32 %v1786, %v1793
        %v1796 = vadd.f32 %v1787, %v1794
        %1798 = vset.pattern.permute.xlu0 0
        %1799 = vperm.xlu0 %1798, %v410
        %v1800 = vpop.permute.xlu0 %1799
        %v1802 = vlaneseq
        %v1803 = vshrl.u32 %v1802, 7
        %v1804 = vsub.s32 1, %v1803
        %v1805 = vrot.slane %v1769, %v1804
        %v1806 = vlaneseq
        %v1807 = vshrl.u32 %v1806, 7
        %v1808 = vsub.s32 1, %v1807
        %v1809 = vrot.slane %v1770, %v1808
        %v1810 = vmul.f32 %v1800, %v1805
        %v1811 = vmul.f32 %v1800, %v1809
        %v1812 = vadd.f32 %v1795, %v1810
        %v1813 = vadd.f32 %v1796, %v1811
        %1815 = vset.pattern.permute.xlu0 0
        %1816 = vperm.xlu0 %1815, %v414
        %v1817 = vpop.permute.xlu0 %1816
        %v1819 = vmul.f32 %v1817, %v861
        %v1820 = vmul.f32 %v1817, %v865
        %v1821 = vadd.f32 %v1812, %v1819
        %v1822 = vadd.f32 %v1813, %v1820
        %1824 = vset.pattern.permute.xlu0 0
        %1825 = vperm.xlu0 %1824, %v411
        %v1826 = vpop.permute.xlu0 %1825
        %v1828 = vlaneseq
        %v1829 = vshrl.u32 %v1828, 7
        %v1830 = vsub.s32 2, %v1829
        %v1831 = vrot.slane %v1769, %v1830
        %v1832 = vlaneseq
        %v1833 = vshrl.u32 %v1832, 7
        %v1834 = vsub.s32 2, %v1833
        %v1835 = vrot.slane %v1770, %v1834
        %v1836 = vmul.f32 %v1826, %v1831
        %v1837 = vmul.f32 %v1826, %v1835
        %v1838 = vadd.f32 %v1821, %v1836
        %v1839 = vadd.f32 %v1822, %v1837
        %1841 = vset.pattern.permute.xlu0 0
        %1842 = vperm.xlu0 %1841, %v415
        %v1843 = vpop.permute.xlu0 %1842
        %v1845 = vmul.f32 %v1843, %v888
        %v1846 = vmul.f32 %v1843, %v892
        %v1847 = vadd.f32 %v1838, %v1845
        %v1848 = vadd.f32 %v1839, %v1846
        %1850 = vset.pattern.permute.xlu0 0
        %1851 = vperm.xlu0 %1850, %v412
        %v1852 = vpop.permute.xlu0 %1851
        %v1854 = vlaneseq
        %v1855 = vshrl.u32 %v1854, 7
        %v1856 = vsub.s32 3, %v1855
        %v1857 = vrot.slane %v1769, %v1856
        %v1858 = vlaneseq
        %v1859 = vshrl.u32 %v1858, 7
        %v1860 = vsub.s32 3, %v1859
        %v1861 = vrot.slane %v1770, %v1860
        %v1862 = vmul.f32 %v1852, %v1857
        %v1863 = vmul.f32 %v1852, %v1861
        %v1864 = vadd.f32 %v1847, %v1862
        %v1865 = vadd.f32 %v1848, %v1863
        %1867 = vset.pattern.permute.xlu0 0
        %1868 = vperm.xlu0 %1867, %v416
        %v1869 = vpop.permute.xlu0 %1868
        %v1871 = vmul.f32 %v1869, %v915
        %v1872 = vmul.f32 %v1869, %v919
        %v1873 = vadd.f32 %v1864, %v1871
        %v1874 = vadd.f32 %v1865, %v1872
        %v1875 = vmax.f32 %v1873, 0.0
        %v1876 = vmax.f32 %v1874, 0.0
        %v1879 = vcombine.low %v1875, %v1876
        %1881 = vst [vmem:[%s352] sm:$0xff] %v1879
        %s1882 = sand.u32 %s247, 1
        %s1883 = scalar_lea.sflag [#allocation3], %s1882
        %s1884 = sand.u32 %s247, 1
        %s1885 = smul.addr %s1884, 8
        %s1886 = scalar_lea.vmem [#allocation2], %s1885
        // Predicated region
        $region61: #{tpu_custom_call.1} parent=59 // pred_check
          %p1887 = pneg %p257
        $region62: #{tpu_custom_call.1} parent=59 // pred_check_branch
          %1889 = sbr.rel (%p1887) target = $region64
        $region63: #{tpu_custom_call.1} parent=59 // pred_region
          %s1891 = ssub.s32 128, 128
          %1892 = vsyncadd %s1883, %s1891
          %s1893 = smul.addr %s24, 2
          %s1894 = smul.addr %s1893, 64
          %s1895 = scalar_lea.hbm %s10, %s1894
          %s1897 = sshll.u32 %s1886, 4
          %s1898 = int_to_ptr.vmem [resolvable:$true] %s1897
          %1900 = dma.vmem_to_hbm [thread:$0]  %s1898, 128, %s1895, %s1883
        $region64: #{tpu_custom_call.1} parent=59 // pred_fallthru
          _
      $region60: #{tpu_custom_call.1} parent=5 // pred_fallthru
        _
      %p1901 = scmp.le.s32.totalorder 2, %s19
      // Predicated region
      $region65: #{tpu_custom_call.1} parent=5 // pred_check
        %p1902 = pneg %p1901
      $region66: #{tpu_custom_call.1} parent=5 // pred_check_branch
        %1904 = sbr.rel (%p1902) target = $region68
      $region67: #{tpu_custom_call.1} parent=5 // pred_region
        %s1905 = ssub.s32 %s19, 2
        // Predicated region
        $region69: #{tpu_custom_call.1} parent=67 // pred_check
          %p1906 = pneg %p263
        $region70: #{tpu_custom_call.1} parent=67 // pred_check_branch
          %1908 = sbr.rel (%p1906) target = $region72
        $region71: #{tpu_custom_call.1} parent=67 // pred_region
          %s1909 = sand.u32 %s248, 1
          %s1910 = scalar_lea.sflag [#allocation3], %s1909
          %s1911 = sand.u32 %s248, 1
          %s1912 = smul.addr %s1911, 8
          %s1913 = scalar_lea.vmem [#allocation2], %s1912
          %1914 = dma.done %s1910, 128
        $region72: #{tpu_custom_call.1} parent=67 // pred_fallthru
          _
      $region68: #{tpu_custom_call.1} parent=5 // pred_fallthru
        _
    $region6: #{tpu_custom_call.1} parent=1 // loop_footer
      %s23 = sadd.s32 1, %s19
    $region7: #{tpu_custom_call.1} parent=1 // loop_footer_branch
      %18 = sbr.rel target = $region3
    $region8: #{tpu_custom_call.1} parent=1 // loop_exit
      _
    %1915 = vsyncpa [#allocation3], 1
    %s1916 = scalar_lea.sflag [#allocation3], 1
    %1917 = vsyncpa %s1916, 1

</llo_original>
